<compile_context>
chip_gen: v7x
topology: tpu7x:2x2x1
jax: 0.10.0
libtpu: 0.0.40
codegen_flags: <defaults>
</compile_context>

<pallas_src>
import functools
import math

import jax
import jax.numpy as jnp
from jax.experimental import pallas as pl
from jax.experimental.pallas import tpu as pltpu

_SQRT1_2 = 0.7071067811865476  # 1/sqrt(2) -> exact (erf) GELU, matches nn.GELU()
_VMEM_LIMIT = 48 * 1024 * 1024  # headroom under v7x's 64 MiB physical VMEM


def _gelu(x):
    # TODO(synk): switch to tanh-approx (EUP) on v5e if VALU becomes the binding
    # slot and model parity allows.
    return 0.5 * x * (1.0 + jax.lax.erf(x * _SQRT1_2))


def _softmax_last(s):
    m = jnp.max(s, axis=-1, keepdims=True)
    p = jnp.exp(s - m)
    return p * pl.reciprocal(jnp.sum(p, axis=-1, keepdims=True), approx=True)


# ----------------------------------------------------------------------------
# Kernel 1: fused per-level decoder (transformer stand-in + class_mlp +
#           projector + output_upscaling), channel-major, one step per batch.
# ----------------------------------------------------------------------------
def _level_decoder_kernel(
    q_ref, pos_ref, cls_ref,
    wc1_ref, bc1_ref, wc2_ref, bc2_ref, wc3_ref, bc3_ref, wp_ref, bp_ref,
    w1_ref, b1_ref, g1_ref, be1_ref, w2_ref, b2_ref,
    cls_out_ref, up_out_ref,
):
    f32, bf16 = jnp.float32, jnp.bfloat16

    x = q_ref[0].astype(f32)        # (D, HW)  channel-major
    pos = pos_ref[0].astype(f32)    # (D, HW)  (broadcast over batch by index_map)
    cls = cls_ref[0].astype(f32)    # (n, D)
    d = x.shape[0]
    scale = 1.0 / math.sqrt(d)
    kv = x + pos

    # --- two-way cross-attention stand-in ------------------------------------
    # TODO(synk): the reference injects an external `transformer` module that is
    # not defined; this deterministic single-layer two-way cross-attention keeps
    # the same (query_embeddings, image_pe, class_embeddings) interface and
    # ignores the embedding mask.
    s1 = jnp.dot(cls.astype(bf16), kv.astype(bf16),
                 preferred_element_type=f32) * scale                    # (n, HW)
    p1 = _softmax_last(s1)
    cls = cls + jax.lax.dot_general(
        p1.astype(bf16), x.astype(bf16), (((1,), (1,)), ((), ())),
        preferred_element_type=f32)                                     # (n, D)

    s2 = jax.lax.dot_general(
        kv.astype(bf16), cls.astype(bf16), (((0,), (1,)), ((), ())),
        preferred_element_type=f32) * scale                             # (HW, n)
    p2 = _softmax_last(s2)
    src = x + jax.lax.dot_general(
        cls.astype(bf16), p2.astype(bf16), (((0,), (1,)), ((), ())),
        preferred_element_type=f32)                                     # (D, HW)

    # --- class branch: MLP(D, D, C2, 3) + per-level Linear projector ---------
    c = jnp.maximum(jnp.dot(cls.astype(bf16), wc1_ref[...],
                            preferred_element_type=f32) + bc1_ref[...], 0.0)
    c = jnp.maximum(jnp.dot(c.astype(bf16), wc2_ref[...],
                            preferred_element_type=f32) + bc2_ref[...], 0.0)
    c = jnp.dot(c.astype(bf16), wc3_ref[...],
                preferred_element_type=f32) + bc3_ref[...]
    c = jnp.dot(c.astype(bf16), wp_ref[...],
                preferred_element_type=f32) + bp_ref[...]               # (n, d_pad)
    cls_out_ref[0] = c.astype(cls_out_ref.dtype)

    # --- upscale branch: ConvT(2,2) -> LayerNorm2d -> GELU -> ConvT(2,2) -----
    # Rows are (di,dj,c1) / (di,dj,ddi,ddj,c2) channel groups, columns are the
    # coarse (i,j) positions, so the output store is already the channel-major
    # pre-depth-to-space slab and no in-kernel transpose is needed.
    t = jax.lax.dot_general(w1_ref[...], src.astype(bf16),
                            (((0,), (0,)), ((), ())),
                            preferred_element_type=f32) + b1_ref[...]   # (4C1, HW)
    c1 = t.shape[0] // 4
    groups = []
    for g in range(4):  # grouped LayerNorm2d: stats over c1 only, per position
        tg = t[g * c1:(g + 1) * c1, :]
        mu = jnp.mean(tg, axis=0, keepdims=True)
        var = jnp.mean((tg - mu) * (tg - mu), axis=0, keepdims=True)
        groups.append((tg - mu) * jax.lax.rsqrt(var + 1e-6))
    y = jnp.concatenate(groups, axis=0)
    y = _gelu(y * g1_ref[...] + be1_ref[...])
    u = jax.lax.dot_general(w2_ref[...], y.astype(bf16),
                            (((0,), (0,)), ((), ())),
                            preferred_element_type=f32) + b2_ref[...]   # (16C2, HW)
    up_out_ref[0] = u.astype(up_out_ref.dtype)                          # bf16 store


def run_level_decoder(lp, q_cm, pos_cm, cls_emb, d_pad):
    B, D, HW = q_cm.shape
    n = cls_emb.shape[1]
    C2 = lp["C2"]
    weights = lp["weights"]

    in_specs = [
        pl.BlockSpec((1, D, HW), lambda b: (b, 0, 0)),
        pl.BlockSpec((1, D, HW), lambda b: (0, 0, 0)),   # broadcast image_pe
        pl.BlockSpec((1, n, D), lambda b: (b, 0, 0)),
    ] + [pl.BlockSpec(w.shape, lambda b: (0, 0)) for w in weights]

    out_specs = (
        pl.BlockSpec((1, n, d_pad), lambda b: (b, 0, 0)),
        pl.BlockSpec((1, 16 * C2, HW), lambda b: (b, 0, 0)),
    )
    out_shape = (
        jax.ShapeDtypeStruct((B, n, d_pad), jnp.float32),
        jax.ShapeDtypeStruct((B, 16 * C2, HW), jnp.bfloat16),
    )
    return pl.pallas_call(
        _level_decoder_kernel,
        grid=(B,),
        in_specs=in_specs,
        out_specs=out_specs,
        out_shape=out_shape,
        compiler_params=pltpu.CompilerParams(
            dimension_semantics=("parallel",),
            vmem_limit_bytes=_VMEM_LIMIT),
    )(q_cm.astype(jnp.float32), pos_cm.astype(jnp.float32),
      cls_emb.astype(jnp.float32), *weights)


# ----------------------------------------------------------------------------
# Kernel 2: projection-first 1x1 conv (folded into class embeddings) +
#           separable bilinear resize + level sum + bias, one step per batch.
# ----------------------------------------------------------------------------
def _aggregate_classify_kernel(*refs, num_levels, resize_flags):
    f32, bf16 = jnp.float32, jnp.bfloat16
    cls_ref, pbsum_ref = refs[0], refs[1]
    o_ref = refs[-1]
    lvl_refs = refs[2:-1]

    cls = cls_ref[0].astype(f32)                       # (n, d_pad)
    n = cls.shape[0]
    bias = jnp.dot(cls, pbsum_ref[...])                # (n, 1)   sum of conv biases

    acc = None
    idx = 0
    for lvl in range(num_levels):
        fm = lvl_refs[idx][0]                          # (C2, HWup)  bf16
        pt = lvl_refs[idx + 1][...]                    # (d_pad, C2) bf16
        idx += 2
        # fold the 1x1 projection into the class embeddings (n << Dmax rows)
        a = jnp.dot(cls.astype(bf16), pt, preferred_element_type=f32)   # (n, C2)
        g = jnp.dot(a.astype(bf16), fm, preferred_element_type=f32)     # (n, HWup)
        if resize_flags[lvl]:
            ay = lvl_refs[idx][...]                    # (H0, Hup) f32
            axT = lvl_refs[idx + 1][...]               # (Wup, W0) f32
            idx += 2
            h_up, w_up = ay.shape[1], axT.shape[0]
            h0, w0 = ay.shape[0], axT.shape[1]
            rows = []
            for ci in range(n):                        # separable bilinear resize
                gi = g[ci:ci + 1, :].reshape(h_up, w_up)
                ri = jnp.dot(ay, jnp.dot(gi, axT))     # (H0, W0)
                rows.append(ri.reshape(1, h0 * w0))
            g = jnp.concatenate(rows, axis=0)          # (n, H0*W0)
        acc = g if acc is None else acc + g
    o_ref[0] = (acc + bias).astype(o_ref.dtype)


def aggregate_and_classify(cls_sum, pb_total, fm_list, pt_list, resize_mats, out_hw):
    B, n, d_pad = cls_sum.shape
    h0w0 = out_hw[0] * out_hw[1]

    args = [cls_sum, pb_total]
    in_specs = [
        pl.BlockSpec((1, n, d_pad), lambda b: (b, 0, 0)),
        pl.BlockSpec(pb_total.shape, lambda b: (0, 0)),
    ]
    resize_flags = []
    for fm, pt, rs in zip(fm_list, pt_list, resize_mats):
        _, C2l, HWl = fm.shape
        args.append(fm)
        in_specs.append(pl.BlockSpec((1, C2l, HWl), lambda b: (b, 0, 0)))
        args.append(pt)
        in_specs.append(pl.BlockSpec(pt.shape, lambda b: (0, 0)))
        if rs is None:
            resize_flags.append(False)
        else:
            ay, axT = rs
            args.append(ay)
            in_specs.append(pl.BlockSpec(ay.shape, lambda b: (0, 0)))
            args.append(axT)
            in_specs.append(pl.BlockSpec(axT.shape, lambda b: (0, 0)))
            resize_flags.append(True)

    kernel = functools.partial(_aggregate_classify_kernel,
                               num_levels=len(fm_list),
                               resize_flags=tuple(resize_flags))
    seg = pl.pallas_call(
        kernel,
        grid=(B,),
        in_specs=in_specs,
        out_specs=pl.BlockSpec((1, n, h0w0), lambda b: (b, 0, 0)),
        out_shape=jax.ShapeDtypeStruct((B, n, h0w0), jnp.float32),
        compiler_params=pltpu.CompilerParams(
            dimension_semantics=("parallel",),
            vmem_limit_bytes=_VMEM_LIMIT),
    )(*args)
    return seg.reshape(B, n, out_hw[0], out_hw[1])


# ----------------------------------------------------------------------------
# Parameter construction (random init; weights packed into kernel-ready
# layouts: bf16 matmul weights, block-diag ConvT2 weight, lane-padded class
# projector, column-vector biases for the channel-major upscale branch).
# ----------------------------------------------------------------------------
def init_level_params(key, D, d_max, d_pad, cls_ds=8):
    first_ds = cls_ds // 2 if cls_ds > 1 else 1
    C1, C2 = D // first_ds, D // cls_ds
    ks = iter(jax.random.split(key, 16))

    def nrm(shape, s=0.05):
        return s * jax.random.normal(next(ks), shape, dtype=jnp.float32)

    # class_mlp = MLP(D, D, C2, 3)                 (stored (in, out) for x @ W)
    wc1, bc1 = nrm((D, D)), nrm((D,))
    wc2, bc2 = nrm((D, D)), nrm((D,))
    wc3, bc3 = nrm((D, C2)), nrm((C2,))
    # output_upscaling: ConvT(D->C1,2,2) + LayerNorm2d(C1) + GELU + ConvT(C1->C2,2,2)
    up1_w, up1_b = nrm((D, C1, 2, 2), 0.1), nrm((C1,), 0.1)
    ln_g, ln_b = jnp.ones((C1,), jnp.float32), jnp.zeros((C1,), jnp.float32)
    up2_w, up2_b = nrm((C1, C2, 2, 2), 0.1), nrm((C2,), 0.1)
    # MultiLevel projectors: Linear(C2 -> d_max) and Conv2d(C2 -> d_max, 1x1)
    clsp_w, clsp_b = nrm((C2, d_max)), nrm((d_max,))
    fmp_w, fmp_b = nrm((d_max, C2)), nrm((d_max,))

    bf16, f32 = jnp.bfloat16, jnp.float32

    def pad_cols(a, width):
        return jnp.pad(a, ((0, 0), (0, width - a.shape[1])))

    def pad_rows(a, height):
        return jnp.pad(a, ((0, height - a.shape[0]), (0, 0)))

    w1mat = jnp.transpose(up1_w, (0, 2, 3, 1)).reshape(D, 4 * C1)       # cols (di,dj,c1)
    w2mat = jnp.transpose(up2_w, (0, 2, 3, 1)).reshape(C1, 4 * C2)      # cols (ddi,ddj,c2)
    w2big = jnp.kron(jnp.eye(4, dtype=f32), w2mat)                      # (4C1, 16C2)

    weights = [
        wc1.astype(bf16), bc1.reshape(1, D).astype(f32),
        wc2.astype(bf16), bc2.reshape(1, D).astype(f32),
        wc3.astype(bf16), bc3.reshape(1, C2).astype(f32),
        pad_cols(clsp_w, d_pad).astype(bf16),                 # lane-padded Linear
        pad_cols(clsp_b.reshape(1, d_max), d_pad).astype(f32),
        w1mat.astype(bf16), jnp.tile(up1_b, 4).reshape(4 * C1, 1).astype(f32),
        jnp.tile(ln_g, 4).reshape(4 * C1, 1).astype(f32),
        jnp.tile(ln_b, 4).reshape(4 * C1, 1).astype(f32),
        w2big.astype(bf16), jnp.tile(up2_b, 16).reshape(16 * C2, 1).astype(f32),
    ]
    return {
        "D": D, "C1": C1, "C2": C2,
        "weights": weights,
        "pt": pad_rows(fmp_w, d_pad).astype(bf16),            # (d_pad, C2) 1x1 conv W
        "pb": pad_rows(fmp_b.reshape(d_max, 1), d_pad).astype(f32),
    }


def init_params(key, level_dims, cls_ds=8):
    d_max = max(d // cls_ds for d in level_dims)      # embed_dims = td // 8
    d_pad = max(128, ((d_max + 127) // 128) * 128)    # lane-pad the class dim
    keys = jax.random.split(key, len(level_dims))
    levels = [init_level_params(k, d, d_max, d_pad, cls_ds)
              for k, d in zip(keys, level_dims)]
    pb_total = functools.reduce(lambda a, b: a + b, [lp["pb"] for lp in levels])
    return {"levels": levels, "d_pad": d_pad, "pb_total": pb_total}


def _bilinear_matrix(out_size, in_size):
    """1-D interpolation matrix matching F.interpolate(mode='bilinear',
    align_corners=False) along one axis."""
    if out_size == in_size:
        return jnp.eye(out_size, dtype=jnp.float32)
    scale = in_size / out_size
    src = (jnp.arange(out_size, dtype=jnp.float32) + 0.5) * scale - 0.5
    src = jnp.clip(src, 0.0, float(in_size - 1))
    i0 = jnp.floor(src).astype(jnp.int32)
    i1 = jnp.minimum(i0 + 1, in_size - 1)
    frac = src - i0.astype(jnp.float32)
    rows = jnp.arange(out_size)
    a = jnp.zeros((out_size, in_size), jnp.float32)
    a = a.at[rows, i0].add(1.0 - frac)
    a = a.at[rows, i1].add(frac)
    return a


# ----------------------------------------------------------------------------
# MultiLevelMaskDecoder.forward
# ----------------------------------------------------------------------------
def multi_level_mask_decoder_forward(params, query_embeddings, support_embeddings,
                                     image_pe, class_embeddings, flag_examples):
    # support_embeddings is accepted but unused, exactly as in the reference.
    del support_embeddings
    levels = params["levels"]
    d_pad = params["d_pad"]
    L = len(query_embeddings)

    # segment_example_logits=False path of _get_pe_result
    _embedding_mask = (jnp.sum(flag_examples, axis=1) > 0).astype(jnp.int32)  # noqa: F841
    # TODO(synk): `_embedding_mask` would be consumed by the injected (undefined)
    # transformer; the stand-in attention inside the level kernel ignores it.

    cls_sum = None
    fm_list, up_sizes = [], []
    for lvl in range(L):
        q = query_embeddings[lvl]                              # (B, D, H, W)
        B, D, H, W = q.shape
        lp = levels[lvl]
        C2 = lp["C2"]

        q_cm = q.reshape(B, D, H * W)                          # free reshape, no transpose
        pos_cm = image_pe[lvl].reshape(1, D, H * W)
        cls_emb = class_embeddings["class_embs"][lvl]          # (B, n, D)

        cls_proj, up_out = run_level_decoder(lp, q_cm, pos_cm, cls_emb, d_pad)
        cls_sum = cls_proj if cls_sum is None else cls_sum + cls_proj

        # depth-to-space de-interleave (pure layout plumbing, done in bf16).
        # TODO(synk): fold this interleave into offset-sliced resize matrices in
        # the aggregate kernel to remove the transpose entirely.
        u = up_out.reshape(B, 2, 2, 2, 2, C2, H, W)
        fm = jnp.transpose(u, (0, 5, 6, 1, 3, 7, 2, 4)).reshape(B, C2, (4 * H) * (4 * W))
        fm_list.append(fm)
        up_sizes.append((4 * H, 4 * W))

    out_hw = up_sizes[0]
    pt_list, resize_mats = [], []
    for lvl in range(L):
        pt_list.append(levels[lvl]["pt"])
        if up_sizes[lvl] == out_hw:
            resize_mats.append(None)
        else:
            ay = _bilinear_matrix(out_hw[0], up_sizes[lvl][0])         # (H0, Hup)
            axT = _bilinear_matrix(out_hw[1], up_sizes[lvl][1]).T      # (Wup, W0)
            resize_mats.append((ay, axT))

    return aggregate_and_classify(cls_sum, params["pb_total"], fm_list,
                                  pt_list, resize_mats, out_hw)


if __name__ == "__main__":
    key = jax.random.PRNGKey(0)
    kp, kq0, kq1, kpe0, kpe1, kc0, kc1, ks0, ks1 = jax.random.split(key, 9)

    B, n_classes, n_examples = 2, 3, 2
    level_dims = (64, 32)                    # transformer_dim per level
    level_hw = ((8, 8), (4, 4))              # image-embedding spatial size per level

    params = init_params(kp, level_dims)

    query_embeddings = [
        jax.random.normal(kq0, (B, level_dims[0], *level_hw[0]), jnp.float32),
        jax.random.normal(kq1, (B, level_dims[1], *level_hw[1]), jnp.float32),
    ]
    support_embeddings = [
        jax.random.normal(ks0, (B, level_dims[0], *level_hw[0]), jnp.float32),
        jax.random.normal(ks1, (B, level_dims[1], *level_hw[1]), jnp.float32),
    ]
    image_pe = [
        jax.random.normal(kpe0, (1, level_dims[0], *level_hw[0]), jnp.float32),
        jax.random.normal(kpe1, (1, level_dims[1], *level_hw[1]), jnp.float32),
    ]
    class_embeddings = {"class_embs": [
        jax.random.normal(kc0, (B, n_classes, level_dims[0]), jnp.float32),
        jax.random.normal(kc1, (B, n_classes, level_dims[1]), jnp.float32),
    ]}
    flag_examples = jnp.ones((B, n_examples, n_classes), jnp.int32)

    seg = multi_level_mask_decoder_forward(
        params, query_embeddings, support_embeddings, image_pe,
        class_embeddings, flag_examples)
    jax.block_until_ready(seg)

    h0, w0 = 4 * level_hw[0][0], 4 * level_hw[0][1]
    assert seg.shape == (B, n_classes, h0, w0), seg.shape
    assert bool(jnp.all(jnp.isfinite(seg)))
    print("KERNEL_OK")
</pallas_src>

<mosaic_0001>
module attributes {stable_mosaic.version = 11 : i64} {
  func.func @_level_decoder_kernel(%arg0: i32, %arg1: memref<1x64x64xf32, #tpu.memory_space<vmem>>, %arg2: memref<1x64x64xf32, #tpu.memory_space<vmem>>, %arg3: memref<1x3x64xf32, #tpu.memory_space<vmem>>, %arg4: memref<64x64xbf16, #tpu.memory_space<vmem>>, %arg5: memref<1x64xf32, #tpu.memory_space<vmem>>, %arg6: memref<64x64xbf16, #tpu.memory_space<vmem>>, %arg7: memref<1x64xf32, #tpu.memory_space<vmem>>, %arg8: memref<64x8xbf16, #tpu.memory_space<vmem>>, %arg9: memref<1x8xf32, #tpu.memory_space<vmem>>, %arg10: memref<8x128xbf16, #tpu.memory_space<vmem>>, %arg11: memref<1x128xf32, #tpu.memory_space<vmem>>, %arg12: memref<64x64xbf16, #tpu.memory_space<vmem>>, %arg13: memref<64x1xf32, #tpu.memory_space<vmem>>, %arg14: memref<64x1xf32, #tpu.memory_space<vmem>>, %arg15: memref<64x1xf32, #tpu.memory_space<vmem>>, %arg16: memref<64x128xbf16, #tpu.memory_space<vmem>>, %arg17: memref<128x1xf32, #tpu.memory_space<vmem>>, %arg18: memref<1x3x128xf32, #tpu.memory_space<vmem>>, %arg19: memref<1x128x64xbf16, #tpu.memory_space<vmem>>) attributes {dimension_semantics = [#tpu.dimension_semantics<parallel>], iteration_bounds = array<i64: 2>, scalar_prefetch = 0 : i64, scratch_operands = 0 : i64, tpu.core_type = #tpu.core_type<tc>, window_params = [{transform_indices = @transform_0, window_bounds = array<i64: 1, 64, 64>}, {pipeline_mode = #tpu.pipeline_mode<synchronous>, transform_indices = @transform_1, window_bounds = array<i64: 1, 64, 64>}, {transform_indices = @transform_2, window_bounds = array<i64: 1, 3, 64>}, {pipeline_mode = #tpu.pipeline_mode<synchronous>, transform_indices = @transform_3, window_bounds = array<i64: 64, 64>}, {pipeline_mode = #tpu.pipeline_mode<synchronous>, transform_indices = @transform_4, window_bounds = array<i64: 1, 64>}, {pipeline_mode = #tpu.pipeline_mode<synchronous>, transform_indices = @transform_5, window_bounds = array<i64: 64, 64>}, {pipeline_mode = #tpu.pipeline_mode<synchronous>, transform_indices = @transform_6, window_bounds = array<i64: 1, 64>}, {pipeline_mode = #tpu.pipeline_mode<synchronous>, transform_indices = @transform_7, window_bounds = array<i64: 64, 8>}, {pipeline_mode = #tpu.pipeline_mode<synchronous>, transform_indices = @transform_8, window_bounds = array<i64: 1, 8>}, {pipeline_mode = #tpu.pipeline_mode<synchronous>, transform_indices = @transform_9, window_bounds = array<i64: 8, 128>}, {pipeline_mode = #tpu.pipeline_mode<synchronous>, transform_indices = @transform_10, window_bounds = array<i64: 1, 128>}, {pipeline_mode = #tpu.pipeline_mode<synchronous>, transform_indices = @transform_11, window_bounds = array<i64: 64, 64>}, {pipeline_mode = #tpu.pipeline_mode<synchronous>, transform_indices = @transform_12, window_bounds = array<i64: 64, 1>}, {pipeline_mode = #tpu.pipeline_mode<synchronous>, transform_indices = @transform_13, window_bounds = array<i64: 64, 1>}, {pipeline_mode = #tpu.pipeline_mode<synchronous>, transform_indices = @transform_14, window_bounds = array<i64: 64, 1>}, {pipeline_mode = #tpu.pipeline_mode<synchronous>, transform_indices = @transform_15, window_bounds = array<i64: 64, 128>}, {pipeline_mode = #tpu.pipeline_mode<synchronous>, transform_indices = @transform_16, window_bounds = array<i64: 128, 1>}, {transform_indices = @transform_17, window_bounds = array<i64: 1, 3, 128>}, {transform_indices = @transform_18, window_bounds = array<i64: 1, 128, 64>}]} {
    %c0 = arith.constant 0 : index
    %c0_0 = arith.constant 0 : index
    %c0_1 = arith.constant 0 : index
    %0 = vector.load %arg1[%c0, %c0_0, %c0_1] : memref<1x64x64xf32, #tpu.memory_space<vmem>>, vector<1x64x64xf32>
    %1 = vector.shape_cast %0 : vector<1x64x64xf32> to vector<64x64xf32>
    %c0_2 = arith.constant 0 : index
    %c0_3 = arith.constant 0 : index
    %c0_4 = arith.constant 0 : index
    %2 = vector.load %arg2[%c0_2, %c0_3, %c0_4] : memref<1x64x64xf32, #tpu.memory_space<vmem>>, vector<1x64x64xf32>
    %3 = vector.shape_cast %2 : vector<1x64x64xf32> to vector<64x64xf32>
    %c0_5 = arith.constant 0 : index
    %c0_6 = arith.constant 0 : index
    %c0_7 = arith.constant 0 : index
    %4 = vector.load %arg3[%c0_5, %c0_6, %c0_7] : memref<1x3x64xf32, #tpu.memory_space<vmem>>, vector<1x3x64xf32>
    %5 = vector.shape_cast %4 : vector<1x3x64xf32> to vector<3x64xf32>
    %6 = arith.addf %1, %3 : vector<64x64xf32>
    %7 = arith.truncf %5 : vector<3x64xf32> to vector<3x64xbf16>
    %8 = arith.truncf %6 : vector<64x64xf32> to vector<64x64xbf16>
    %cst = arith.constant dense<0.000000e+00> : vector<3x64xf32>
    %9 = tpu.matmul %7, %8, %cst {dimension_numbers = #tpu.dot_dimension_numbers<[1], [0], [0], [1], [0, 0, 1, 1], [], []>} : vector<3x64xbf16>, vector<64x64xbf16>, vector<3x64xf32> -> vector<3x64xf32>
    %cst_8 = arith.constant 1.250000e-01 : f32
    %10 = vector.broadcast %cst_8 : f32 to vector<3x64xf32>
    %11 = arith.mulf %9, %10 : vector<3x64xf32>
    %cst_9 = arith.constant dense<0xFF800000> : vector<3xf32>
    %12 = vector.multi_reduction <maximumf>, %11, %cst_9 [1] : vector<3x64xf32> to vector<3xf32>
    %13 = vector.shape_cast %12 : vector<3xf32> to vector<3x1xf32>
    %14 = vector.broadcast %13 : vector<3x1xf32> to vector<3x64xf32>
    %15 = arith.subf %11, %14 : vector<3x64xf32>
    %16 = math.exp %15 : vector<3x64xf32>
    %cst_10 = arith.constant dense<0.000000e+00> : vector<3xf32>
    %17 = vector.multi_reduction <add>, %16, %cst_10 [1] : vector<3x64xf32> to vector<3xf32>
    %18 = vector.shape_cast %17 : vector<3xf32> to vector<3x1xf32>
    %19 = tpu.reciprocal %18 {approx = true} : vector<3x1xf32> -> vector<3x1xf32>
    %20 = vector.broadcast %19 : vector<3x1xf32> to vector<3x64xf32>
    %21 = arith.mulf %16, %20 : vector<3x64xf32>
    %22 = arith.truncf %21 : vector<3x64xf32> to vector<3x64xbf16>
    %23 = arith.truncf %1 : vector<64x64xf32> to vector<64x64xbf16>
    %cst_11 = arith.constant dense<0.000000e+00> : vector<3x64xf32>
    %24 = tpu.matmul %22, %23, %cst_11 {dimension_numbers = #tpu.dot_dimension_numbers<[1], [1], [0], [0], [0, 0, 1, 0], [], []>} : vector<3x64xbf16>, vector<64x64xbf16>, vector<3x64xf32> -> vector<3x64xf32>
    %25 = arith.addf %5, %24 : vector<3x64xf32>
    %26 = arith.truncf %6 : vector<64x64xf32> to vector<64x64xbf16>
    %27 = arith.truncf %25 : vector<3x64xf32> to vector<3x64xbf16>
    %cst_12 = arith.constant dense<0.000000e+00> : vector<64x3xf32>
    %28 = tpu.matmul %26, %27, %cst_12 {dimension_numbers = #tpu.dot_dimension_numbers<[0], [1], [1], [0], [0, 1, 1, 0], [], []>} : vector<64x64xbf16>, vector<3x64xbf16>, vector<64x3xf32> -> vector<64x3xf32>
    %cst_13 = arith.constant 1.250000e-01 : f32
    %29 = vector.broadcast %cst_13 : f32 to vector<64x3xf32>
    %30 = arith.mulf %28, %29 : vector<64x3xf32>
    %cst_14 = arith.constant dense<0xFF800000> : vector<64xf32>
    %31 = vector.multi_reduction <maximumf>, %30, %cst_14 [1] : vector<64x3xf32> to vector<64xf32>
    %32 = vector.shape_cast %31 : vector<64xf32> to vector<64x1xf32>
    %33 = vector.broadcast %32 : vector<64x1xf32> to vector<64x3xf32>
    %34 = arith.subf %30, %33 : vector<64x3xf32>
    %35 = math.exp %34 : vector<64x3xf32>
    %cst_15 = arith.constant dense<0.000000e+00> : vector<64xf32>
    %36 = vector.multi_reduction <add>, %35, %cst_15 [1] : vector<64x3xf32> to vector<64xf32>
    %37 = vector.shape_cast %36 : vector<64xf32> to vector<64x1xf32>
    %38 = tpu.reciprocal %37 {approx = true} : vector<64x1xf32> -> vector<64x1xf32>
    %39 = vector.broadcast %38 : vector<64x1xf32> to vector<64x3xf32>
    %40 = arith.mulf %35, %39 : vector<64x3xf32>
    %41 = arith.truncf %25 : vector<3x64xf32> to vector<3x64xbf16>
    %42 = arith.truncf %40 : vector<64x3xf32> to vector<64x3xbf16>
    %cst_16 = arith.constant dense<0.000000e+00> : vector<64x64xf32>
    %43 = tpu.matmul %41, %42, %cst_16 {dimension_numbers = #tpu.dot_dimension_numbers<[0], [1], [1], [0], [0, 1, 1, 0], [], []>} : vector<3x64xbf16>, vector<64x3xbf16>, vector<64x64xf32> -> vector<64x64xf32>
    %44 = arith.addf %1, %43 : vector<64x64xf32>
    %45 = arith.truncf %25 : vector<3x64xf32> to vector<3x64xbf16>
    %c0_17 = arith.constant 0 : index
    %c0_18 = arith.constant 0 : index
    %46 = vector.load %arg4[%c0_17, %c0_18] : memref<64x64xbf16, #tpu.memory_space<vmem>>, vector<64x64xbf16>
    %cst_19 = arith.constant dense<0.000000e+00> : vector<3x64xf32>
    %47 = tpu.matmul %45, %46, %cst_19 {dimension_numbers = #tpu.dot_dimension_numbers<[1], [0], [0], [1], [0, 0, 1, 1], [], []>} : vector<3x64xbf16>, vector<64x64xbf16>, vector<3x64xf32> -> vector<3x64xf32>
    %c0_20 = arith.constant 0 : index
    %c0_21 = arith.constant 0 : index
    %48 = vector.load %arg5[%c0_20, %c0_21] : memref<1x64xf32, #tpu.memory_space<vmem>>, vector<1x64xf32>
    %49 = vector.broadcast %48 : vector<1x64xf32> to vector<3x64xf32>
    %50 = arith.addf %47, %49 : vector<3x64xf32>
    %cst_22 = arith.constant 0.000000e+00 : f32
    %51 = vector.broadcast %cst_22 : f32 to vector<3x64xf32>
    %52 = arith.maximumf %50, %51 : vector<3x64xf32>
    %53 = arith.truncf %52 : vector<3x64xf32> to vector<3x64xbf16>
    %c0_23 = arith.constant 0 : index
    %c0_24 = arith.constant 0 : index
    %54 = vector.load %arg6[%c0_23, %c0_24] : memref<64x64xbf16, #tpu.memory_space<vmem>>, vector<64x64xbf16>
    %cst_25 = arith.constant dense<0.000000e+00> : vector<3x64xf32>
    %55 = tpu.matmul %53, %54, %cst_25 {dimension_numbers = #tpu.dot_dimension_numbers<[1], [0], [0], [1], [0, 0, 1, 1], [], []>} : vector<3x64xbf16>, vector<64x64xbf16>, vector<3x64xf32> -> vector<3x64xf32>
    %c0_26 = arith.constant 0 : index
    %c0_27 = arith.constant 0 : index
    %56 = vector.load %arg7[%c0_26, %c0_27] : memref<1x64xf32, #tpu.memory_space<vmem>>, vector<1x64xf32>
    %57 = vector.broadcast %56 : vector<1x64xf32> to vector<3x64xf32>
    %58 = arith.addf %55, %57 : vector<3x64xf32>
    %cst_28 = arith.constant 0.000000e+00 : f32
    %59 = vector.broadcast %cst_28 : f32 to vector<3x64xf32>
    %60 = arith.maximumf %58, %59 : vector<3x64xf32>
    %61 = arith.truncf %60 : vector<3x64xf32> to vector<3x64xbf16>
    %c0_29 = arith.constant 0 : index
    %c0_30 = arith.constant 0 : index
    %62 = vector.load %arg8[%c0_29, %c0_30] : memref<64x8xbf16, #tpu.memory_space<vmem>>, vector<64x8xbf16>
    %cst_31 = arith.constant dense<0.000000e+00> : vector<3x8xf32>
    %63 = tpu.matmul %61, %62, %cst_31 {dimension_numbers = #tpu.dot_dimension_numbers<[1], [0], [0], [1], [0, 0, 1, 1], [], []>} : vector<3x64xbf16>, vector<64x8xbf16>, vector<3x8xf32> -> vector<3x8xf32>
    %c0_32 = arith.constant 0 : index
    %c0_33 = arith.constant 0 : index
    %64 = vector.load %arg9[%c0_32, %c0_33] : memref<1x8xf32, #tpu.memory_space<vmem>>, vector<1x8xf32>
    %65 = vector.broadcast %64 : vector<1x8xf32> to vector<3x8xf32>
    %66 = arith.addf %63, %65 : vector<3x8xf32>
    %67 = arith.truncf %66 : vector<3x8xf32> to vector<3x8xbf16>
    %c0_34 = arith.constant 0 : index
    %c0_35 = arith.constant 0 : index
    %68 = vector.load %arg10[%c0_34, %c0_35] : memref<8x128xbf16, #tpu.memory_space<vmem>>, vector<8x128xbf16>
    %cst_36 = arith.constant dense<0.000000e+00> : vector<3x128xf32>
    %69 = tpu.matmul %67, %68, %cst_36 {dimension_numbers = #tpu.dot_dimension_numbers<[1], [0], [0], [1], [0, 0, 1, 1], [], []>} : vector<3x8xbf16>, vector<8x128xbf16>, vector<3x128xf32> -> vector<3x128xf32>
    %c0_37 = arith.constant 0 : index
    %c0_38 = arith.constant 0 : index
    %70 = vector.load %arg11[%c0_37, %c0_38] : memref<1x128xf32, #tpu.memory_space<vmem>>, vector<1x128xf32>
    %71 = vector.broadcast %70 : vector<1x128xf32> to vector<3x128xf32>
    %72 = arith.addf %69, %71 : vector<3x128xf32>
    %c0_39 = arith.constant 0 : index
    %c0_40 = arith.constant 0 : index
    %c0_41 = arith.constant 0 : index
    %73 = vector.load %arg18[%c0_39, %c0_40, %c0_41] : memref<1x3x128xf32, #tpu.memory_space<vmem>>, vector<1x3x128xf32>
    %74 = vector.shape_cast %73 : vector<1x3x128xf32> to vector<3x128xf32>
    %75 = vector.shape_cast %72 : vector<3x128xf32> to vector<1x3x128xf32>
    tpu.vector_store %arg18[%c0_39, %c0_40, %c0_41], %75 {strides = array<i32>} : memref<1x3x128xf32, #tpu.memory_space<vmem>>, vector<1x3x128xf32>,
    %c0_42 = arith.constant 0 : index
    %c0_43 = arith.constant 0 : index
    %76 = vector.load %arg12[%c0_42, %c0_43] : memref<64x64xbf16, #tpu.memory_space<vmem>>, vector<64x64xbf16>
    %77 = arith.truncf %44 : vector<64x64xf32> to vector<64x64xbf16>
    %cst_44 = arith.constant dense<0.000000e+00> : vector<64x64xf32>
    %78 = tpu.matmul %76, %77, %cst_44 {dimension_numbers = #tpu.dot_dimension_numbers<[0], [0], [1], [1], [0, 1, 1, 1], [], []>} : vector<64x64xbf16>, vector<64x64xbf16>, vector<64x64xf32> -> vector<64x64xf32>
    %c0_45 = arith.constant 0 : index
    %c0_46 = arith.constant 0 : index
    %79 = vector.load %arg13[%c0_45, %c0_46] : memref<64x1xf32, #tpu.memory_space<vmem>>, vector<64x1xf32>
    %80 = vector.broadcast %79 : vector<64x1xf32> to vector<64x64xf32>
    %81 = arith.addf %78, %80 : vector<64x64xf32>
    %82 = vector.extract_strided_slice %81 {offsets = [0, 0], sizes = [16, 64], strides = [1, 1]} : vector<64x64xf32> to vector<16x64xf32>
    %cst_47 = arith.constant dense<0.000000e+00> : vector<64xf32>
    %83 = vector.multi_reduction <add>, %82, %cst_47 [0] : vector<16x64xf32> to vector<64xf32>
    %84 = vector.shape_cast %83 : vector<64xf32> to vector<1x64xf32>
    %cst_48 = arith.constant 1.600000e+01 : f32
    %85 = vector.broadcast %cst_48 : f32 to vector<1x64xf32>
    %86 = arith.divf %84, %85 : vector<1x64xf32>
    %87 = vector.broadcast %86 : vector<1x64xf32> to vector<16x64xf32>
    %88 = arith.subf %82, %87 : vector<16x64xf32>
    %89 = vector.broadcast %86 : vector<1x64xf32> to vector<16x64xf32>
    %90 = arith.subf %82, %89 : vector<16x64xf32>
    %91 = arith.mulf %88, %90 : vector<16x64xf32>
    %cst_49 = arith.constant dense<0.000000e+00> : vector<64xf32>
    %92 = vector.multi_reduction <add>, %91, %cst_49 [0] : vector<16x64xf32> to vector<64xf32>
    %93 = vector.shape_cast %92 : vector<64xf32> to vector<1x64xf32>
    %cst_50 = arith.constant 1.600000e+01 : f32
    %94 = vector.broadcast %cst_50 : f32 to vector<1x64xf32>
    %95 = arith.divf %93, %94 : vector<1x64xf32>
    %96 = vector.broadcast %86 : vector<1x64xf32> to vector<16x64xf32>
    %97 = arith.subf %82, %96 : vector<16x64xf32>
    %cst_51 = arith.constant 9.99999997E-7 : f32
    %98 = vector.broadcast %cst_51 : f32 to vector<1x64xf32>
    %99 = arith.addf %95, %98 : vector<1x64xf32>
    %100 = math.rsqrt %99 : vector<1x64xf32>
    %101 = vector.broadcast %100 : vector<1x64xf32> to vector<16x64xf32>
    %102 = arith.mulf %97, %101 : vector<16x64xf32>
    %103 = vector.extract_strided_slice %81 {offsets = [16, 0], sizes = [16, 64], strides = [1, 1]} : vector<64x64xf32> to vector<16x64xf32>
    %cst_52 = arith.constant dense<0.000000e+00> : vector<64xf32>
    %104 = vector.multi_reduction <add>, %103, %cst_52 [0] : vector<16x64xf32> to vector<64xf32>
    %105 = vector.shape_cast %104 : vector<64xf32> to vector<1x64xf32>
    %cst_53 = arith.constant 1.600000e+01 : f32
    %106 = vector.broadcast %cst_53 : f32 to vector<1x64xf32>
    %107 = arith.divf %105, %106 : vector<1x64xf32>
    %108 = vector.broadcast %107 : vector<1x64xf32> to vector<16x64xf32>
    %109 = arith.subf %103, %108 : vector<16x64xf32>
    %110 = vector.broadcast %107 : vector<1x64xf32> to vector<16x64xf32>
    %111 = arith.subf %103, %110 : vector<16x64xf32>
    %112 = arith.mulf %109, %111 : vector<16x64xf32>
    %cst_54 = arith.constant dense<0.000000e+00> : vector<64xf32>
    %113 = vector.multi_reduction <add>, %112, %cst_54 [0] : vector<16x64xf32> to vector<64xf32>
    %114 = vector.shape_cast %113 : vector<64xf32> to vector<1x64xf32>
    %cst_55 = arith.constant 1.600000e+01 : f32
    %115 = vector.broadcast %cst_55 : f32 to vector<1x64xf32>
    %116 = arith.divf %114, %115 : vector<1x64xf32>
    %117 = vector.broadcast %107 : vector<1x64xf32> to vector<16x64xf32>
    %118 = arith.subf %103, %117 : vector<16x64xf32>
    %cst_56 = arith.constant 9.99999997E-7 : f32
    %119 = vector.broadcast %cst_56 : f32 to vector<1x64xf32>
    %120 = arith.addf %116, %119 : vector<1x64xf32>
    %121 = math.rsqrt %120 : vector<1x64xf32>
    %122 = vector.broadcast %121 : vector<1x64xf32> to vector<16x64xf32>
    %123 = arith.mulf %118, %122 : vector<16x64xf32>
    %124 = vector.extract_strided_slice %81 {offsets = [32, 0], sizes = [16, 64], strides = [1, 1]} : vector<64x64xf32> to vector<16x64xf32>
    %cst_57 = arith.constant dense<0.000000e+00> : vector<64xf32>
    %125 = vector.multi_reduction <add>, %124, %cst_57 [0] : vector<16x64xf32> to vector<64xf32>
    %126 = vector.shape_cast %125 : vector<64xf32> to vector<1x64xf32>
    %cst_58 = arith.constant 1.600000e+01 : f32
    %127 = vector.broadcast %cst_58 : f32 to vector<1x64xf32>
    %128 = arith.divf %126, %127 : vector<1x64xf32>
    %129 = vector.broadcast %128 : vector<1x64xf32> to vector<16x64xf32>
    %130 = arith.subf %124, %129 : vector<16x64xf32>
    %131 = vector.broadcast %128 : vector<1x64xf32> to vector<16x64xf32>
    %132 = arith.subf %124, %131 : vector<16x64xf32>
    %133 = arith.mulf %130, %132 : vector<16x64xf32>
    %cst_59 = arith.constant dense<0.000000e+00> : vector<64xf32>
    %134 = vector.multi_reduction <add>, %133, %cst_59 [0] : vector<16x64xf32> to vector<64xf32>
    %135 = vector.shape_cast %134 : vector<64xf32> to vector<1x64xf32>
    %cst_60 = arith.constant 1.600000e+01 : f32
    %136 = vector.broadcast %cst_60 : f32 to vector<1x64xf32>
    %137 = arith.divf %135, %136 : vector<1x64xf32>
    %138 = vector.broadcast %128 : vector<1x64xf32> to vector<16x64xf32>
    %139 = arith.subf %124, %138 : vector<16x64xf32>
    %cst_61 = arith.constant 9.99999997E-7 : f32
    %140 = vector.broadcast %cst_61 : f32 to vector<1x64xf32>
    %141 = arith.addf %137, %140 : vector<1x64xf32>
    %142 = math.rsqrt %141 : vector<1x64xf32>
    %143 = vector.broadcast %142 : vector<1x64xf32> to vector<16x64xf32>
    %144 = arith.mulf %139, %143 : vector<16x64xf32>
    %145 = vector.extract_strided_slice %81 {offsets = [48, 0], sizes = [16, 64], strides = [1, 1]} : vector<64x64xf32> to vector<16x64xf32>
    %cst_62 = arith.constant dense<0.000000e+00> : vector<64xf32>
    %146 = vector.multi_reduction <add>, %145, %cst_62 [0] : vector<16x64xf32> to vector<64xf32>
    %147 = vector.shape_cast %146 : vector<64xf32> to vector<1x64xf32>
    %cst_63 = arith.constant 1.600000e+01 : f32
    %148 = vector.broadcast %cst_63 : f32 to vector<1x64xf32>
    %149 = arith.divf %147, %148 : vector<1x64xf32>
    %150 = vector.broadcast %149 : vector<1x64xf32> to vector<16x64xf32>
    %151 = arith.subf %145, %150 : vector<16x64xf32>
    %152 = vector.broadcast %149 : vector<1x64xf32> to vector<16x64xf32>
    %153 = arith.subf %145, %152 : vector<16x64xf32>
    %154 = arith.mulf %151, %153 : vector<16x64xf32>
    %cst_64 = arith.constant dense<0.000000e+00> : vector<64xf32>
    %155 = vector.multi_reduction <add>, %154, %cst_64 [0] : vector<16x64xf32> to vector<64xf32>
    %156 = vector.shape_cast %155 : vector<64xf32> to vector<1x64xf32>
    %cst_65 = arith.constant 1.600000e+01 : f32
    %157 = vector.broadcast %cst_65 : f32 to vector<1x64xf32>
    %158 = arith.divf %156, %157 : vector<1x64xf32>
    %159 = vector.broadcast %149 : vector<1x64xf32> to vector<16x64xf32>
    %160 = arith.subf %145, %159 : vector<16x64xf32>
    %cst_66 = arith.constant 9.99999997E-7 : f32
    %161 = vector.broadcast %cst_66 : f32 to vector<1x64xf32>
    %162 = arith.addf %158, %161 : vector<1x64xf32>
    %163 = math.rsqrt %162 : vector<1x64xf32>
    %164 = vector.broadcast %163 : vector<1x64xf32> to vector<16x64xf32>
    %165 = arith.mulf %160, %164 : vector<16x64xf32>
    %166 = tpu.concatenate %102, %123, %144, %165 in 0 : vector<16x64xf32>, vector<16x64xf32>, vector<16x64xf32>, vector<16x64xf32> -> vector<64x64xf32>
    %c0_67 = arith.constant 0 : index
    %c0_68 = arith.constant 0 : index
    %167 = vector.load %arg14[%c0_67, %c0_68] : memref<64x1xf32, #tpu.memory_space<vmem>>, vector<64x1xf32>
    %168 = vector.broadcast %167 : vector<64x1xf32> to vector<64x64xf32>
    %169 = arith.mulf %166, %168 : vector<64x64xf32>
    %c0_69 = arith.constant 0 : index
    %c0_70 = arith.constant 0 : index
    %170 = vector.load %arg15[%c0_69, %c0_70] : memref<64x1xf32, #tpu.memory_space<vmem>>, vector<64x1xf32>
    %171 = vector.broadcast %170 : vector<64x1xf32> to vector<64x64xf32>
    %172 = arith.addf %169, %171 : vector<64x64xf32>
    %cst_71 = arith.constant 5.000000e-01 : f32
    %173 = vector.broadcast %cst_71 : f32 to vector<64x64xf32>
    %174 = arith.mulf %173, %172 : vector<64x64xf32>
    %cst_72 = arith.constant 0.707106769 : f32
    %175 = vector.broadcast %cst_72 : f32 to vector<64x64xf32>
    %176 = arith.mulf %172, %175 : vector<64x64xf32>
    %177 = math.erf %176 : vector<64x64xf32>
    %cst_73 = arith.constant 1.000000e+00 : f32
    %178 = vector.broadcast %cst_73 : f32 to vector<64x64xf32>
    %179 = arith.addf %178, %177 : vector<64x64xf32>
    %180 = arith.mulf %174, %179 : vector<64x64xf32>
    %c0_74 = arith.constant 0 : index
    %c0_75 = arith.constant 0 : index
    %181 = vector.load %arg16[%c0_74, %c0_75] : memref<64x128xbf16, #tpu.memory_space<vmem>>, vector<64x128xbf16>
    %182 = arith.truncf %180 : vector<64x64xf32> to vector<64x64xbf16>
    %cst_76 = arith.constant dense<0.000000e+00> : vector<128x64xf32>
    %183 = tpu.matmul %181, %182, %cst_76 {dimension_numbers = #tpu.dot_dimension_numbers<[0], [0], [1], [1], [0, 1, 1, 1], [], []>} : vector<64x128xbf16>, vector<64x64xbf16>, vector<128x64xf32> -> vector<128x64xf32>
    %c0_77 = arith.constant 0 : index
    %c0_78 = arith.constant 0 : index
    %184 = vector.load %arg17[%c0_77, %c0_78] : memref<128x1xf32, #tpu.memory_space<vmem>>, vector<128x1xf32>
    %185 = vector.broadcast %184 : vector<128x1xf32> to vector<128x64xf32>
    %186 = arith.addf %183, %185 : vector<128x64xf32>
    %187 = arith.truncf %186 : vector<128x64xf32> to vector<128x64xbf16>
    %c0_79 = arith.constant 0 : index
    %c0_80 = arith.constant 0 : index
    %c0_81 = arith.constant 0 : index
    %188 = vector.load %arg19[%c0_79, %c0_80, %c0_81] : memref<1x128x64xbf16, #tpu.memory_space<vmem>>, vector<1x128x64xbf16>
    %189 = vector.shape_cast %188 : vector<1x128x64xbf16> to vector<128x64xbf16>
    %190 = vector.shape_cast %187 : vector<128x64xbf16> to vector<1x128x64xbf16>
    tpu.vector_store %arg19[%c0_79, %c0_80, %c0_81], %190 {strides = array<i32>} : memref<1x128x64xbf16, #tpu.memory_space<vmem>>, vector<1x128x64xbf16>,
    return
  }
  func.func @transform_0(%arg0: i32) -> (i32, i32, i32) {
    %c0_i32 = arith.constant 0 : i32
    %c0_i32_0 = arith.constant 0 : i32
    %c0_i32_1 = arith.constant 0 : i32
    return %arg0, %c0_i32, %c0_i32_0 : i32, i32, i32
  }
  func.func @transform_1(%arg0: i32) -> (i32, i32, i32) {
    %c0_i32 = arith.constant 0 : i32
    %c0_i32_0 = arith.constant 0 : i32
    %c0_i32_1 = arith.constant 0 : i32
    %c0_i32_2 = arith.constant 0 : i32
    return %c0_i32, %c0_i32_0, %c0_i32_1 : i32, i32, i32
  }
  func.func @transform_2(%arg0: i32) -> (i32, i32, i32) {
    %c0_i32 = arith.constant 0 : i32
    %c0_i32_0 = arith.constant 0 : i32
    %c0_i32_1 = arith.constant 0 : i32
    return %arg0, %c0_i32, %c0_i32_0 : i32, i32, i32
  }
  func.func @transform_3(%arg0: i32) -> (i32, i32) {
    %c0_i32 = arith.constant 0 : i32
    %c0_i32_0 = arith.constant 0 : i32
    %c0_i32_1 = arith.constant 0 : i32
    return %c0_i32, %c0_i32_0 : i32, i32
  }
  func.func @transform_4(%arg0: i32) -> (i32, i32) {
    %c0_i32 = arith.constant 0 : i32
    %c0_i32_0 = arith.constant 0 : i32
    %c0_i32_1 = arith.constant 0 : i32
    return %c0_i32, %c0_i32_0 : i32, i32
  }
  func.func @transform_5(%arg0: i32) -> (i32, i32) {
    %c0_i32 = arith.constant 0 : i32
    %c0_i32_0 = arith.constant 0 : i32
    %c0_i32_1 = arith.constant 0 : i32
    return %c0_i32, %c0_i32_0 : i32, i32
  }
  func.func @transform_6(%arg0: i32) -> (i32, i32) {
    %c0_i32 = arith.constant 0 : i32
    %c0_i32_0 = arith.constant 0 : i32
    %c0_i32_1 = arith.constant 0 : i32
    return %c0_i32, %c0_i32_0 : i32, i32
  }
  func.func @transform_7(%arg0: i32) -> (i32, i32) {
    %c0_i32 = arith.constant 0 : i32
    %c0_i32_0 = arith.constant 0 : i32
    %c0_i32_1 = arith.constant 0 : i32
    return %c0_i32, %c0_i32_0 : i32, i32
  }
  func.func @transform_8(%arg0: i32) -> (i32, i32) {
    %c0_i32 = arith.constant 0 : i32
    %c0_i32_0 = arith.constant 0 : i32
    %c0_i32_1 = arith.constant 0 : i32
    return %c0_i32, %c0_i32_0 : i32, i32
  }
  func.func @transform_9(%arg0: i32) -> (i32, i32) {
    %c0_i32 = arith.constant 0 : i32
    %c0_i32_0 = arith.constant 0 : i32
    %c0_i32_1 = arith.constant 0 : i32
    return %c0_i32, %c0_i32_0 : i32, i32
  }
  func.func @transform_10(%arg0: i32) -> (i32, i32) {
    %c0_i32 = arith.constant 0 : i32
    %c0_i32_0 = arith.constant 0 : i32
    %c0_i32_1 = arith.constant 0 : i32
    return %c0_i32, %c0_i32_0 : i32, i32
  }
  func.func @transform_11(%arg0: i32) -> (i32, i32) {
    %c0_i32 = arith.constant 0 : i32
    %c0_i32_0 = arith.constant 0 : i32
    %c0_i32_1 = arith.constant 0 : i32
    return %c0_i32, %c0_i32_0 : i32, i32
  }
  func.func @transform_12(%arg0: i32) -> (i32, i32) {
    %c0_i32 = arith.constant 0 : i32
    %c0_i32_0 = arith.constant 0 : i32
    %c0_i32_1 = arith.constant 0 : i32
    return %c0_i32, %c0_i32_0 : i32, i32
  }
  func.func @transform_13(%arg0: i32) -> (i32, i32) {
    %c0_i32 = arith.constant 0 : i32
    %c0_i32_0 = arith.constant 0 : i32
    %c0_i32_1 = arith.constant 0 : i32
    return %c0_i32, %c0_i32_0 : i32, i32
  }
  func.func @transform_14(%arg0: i32) -> (i32, i32) {
    %c0_i32 = arith.constant 0 : i32
    %c0_i32_0 = arith.constant 0 : i32
    %c0_i32_1 = arith.constant 0 : i32
    return %c0_i32, %c0_i32_0 : i32, i32
  }
  func.func @transform_15(%arg0: i32) -> (i32, i32) {
    %c0_i32 = arith.constant 0 : i32
    %c0_i32_0 = arith.constant 0 : i32
    %c0_i32_1 = arith.constant 0 : i32
    return %c0_i32, %c0_i32_0 : i32, i32
  }
  func.func @transform_16(%arg0: i32) -> (i32, i32) {
    %c0_i32 = arith.constant 0 : i32
    %c0_i32_0 = arith.constant 0 : i32
    %c0_i32_1 = arith.constant 0 : i32
    return %c0_i32, %c0_i32_0 : i32, i32
  }
  func.func @transform_17(%arg0: i32) -> (i32, i32, i32) {
    %c0_i32 = arith.constant 0 : i32
    %c0_i32_0 = arith.constant 0 : i32
    %c0_i32_1 = arith.constant 0 : i32
    return %arg0, %c0_i32, %c0_i32_0 : i32, i32, i32
  }
  func.func @transform_18(%arg0: i32) -> (i32, i32, i32) {
    %c0_i32 = arith.constant 0 : i32
    %c0_i32_0 = arith.constant 0 : i32
    %c0_i32_1 = arith.constant 0 : i32
    return %arg0, %c0_i32, %c0_i32_0 : i32, i32, i32
  }
}

</mosaic_0001>

<llo_original>
// kernel: tpu_custom_call.1
$region0: #{tpu_custom_call.1}
  #allocation0 [shape = 'u32[]', space=smem, size = 0x4, offset = 0x4, fixed_abs, tag = 'smem constant byte address 0x4 - core index']
  #allocation1 [shape = 'u32[144,128]{1,0:T(1,128)}', space=vmem, size = 0x12000, scoped, tag = 'internal scratch']
  %s0 = inlined_call_operand.vmem [shape: f32[2,64,64], index: 0, kind: input, shape index: {}]
  %s1 = inlined_call_operand.vmem [shape: f32[1,64,64], index: 1, kind: input, shape index: {}]
  %s2 = inlined_call_operand.vmem [shape: f32[2,3,64], index: 2, kind: input, shape index: {}]
  %s3 = inlined_call_operand.vmem [shape: bf16[64,64], index: 3, kind: input, shape index: {}]
  %s4 = inlined_call_operand.vmem [shape: f32[1,64], index: 4, kind: input, shape index: {}]
  %s5 = inlined_call_operand.vmem [shape: bf16[64,64], index: 5, kind: input, shape index: {}]
  %s6 = inlined_call_operand.vmem [shape: f32[1,64], index: 6, kind: input, shape index: {}]
  %s7 = inlined_call_operand.vmem [shape: bf16[64,8], index: 7, kind: input, shape index: {}]
  %s8 = inlined_call_operand.vmem [shape: f32[1,8], index: 8, kind: input, shape index: {}]
  %s9 = inlined_call_operand.vmem [shape: bf16[8,128], index: 9, kind: input, shape index: {}]
  %s10 = inlined_call_operand.vmem [shape: f32[1,128], index: 10, kind: input, shape index: {}]
  %s11 = inlined_call_operand.vmem [shape: bf16[64,64], index: 11, kind: input, shape index: {}]
  %s12 = inlined_call_operand.vmem [shape: f32[64,1], index: 12, kind: input, shape index: {}]
  %s13 = inlined_call_operand.vmem [shape: f32[64,1], index: 13, kind: input, shape index: {}]
  %s14 = inlined_call_operand.vmem [shape: f32[64,1], index: 14, kind: input, shape index: {}]
  %s15 = inlined_call_operand.vmem [shape: bf16[64,128], index: 15, kind: input, shape index: {}]
  %s16 = inlined_call_operand.vmem [shape: f32[128,1], index: 16, kind: input, shape index: {}]
  %s17 = inlined_call_operand.vmem [shape: f32[2,3,128], index: 17, kind: output, shape index: {0}]
  %s18 = inlined_call_operand.vmem [shape: bf16[2,128,64], index: 18, kind: output, shape index: {1}]
  %19 = xla_tuple %s17, %s18
  %s20 = sld [smem:[#allocation0]]
  $region109: #{tpu_custom_call.1} parent=0
    _
  %s22 = ssub.s32 1, %s20
  %s23 = scalar_select 0, %s22, %s20
  loop: start=0, step=1, limit=4
  $region2: #{tpu_custom_call.1} parent=0 // loop_pre_header
    _
  $region3: #{tpu_custom_call.1} parent=0 // loop_header
    %s25 = sphi 0, %s29
    %p26 = scmp.ge.s32.totalorder %s25, 4
    %s35 = sphi 0, %s37
    %s38 = sphi 0, %s35
    %s39 = sphi 0, %s38
    %s55 = sphi 0, %s39
    %s59 = sphi 0, %s59
    %s61 = sphi 0, %s59
    %s62 = sphi 0, %s61
    %s76 = sphi 0, %s62
    %s82 = sphi 0, %s84
    %s85 = sphi 0, %s82
    %s86 = sphi 0, %s85
    %s102 = sphi 0, %s86
    %s106 = sphi 0, %s106
    %s108 = sphi 0, %s106
    %s109 = sphi 0, %s108
    %s123 = sphi 0, %s109
    %s127 = sphi 0, %s127
    %s129 = sphi 0, %s127
    %s130 = sphi 0, %s129
    %s144 = sphi 0, %s130
    %s148 = sphi 0, %s148
    %s150 = sphi 0, %s148
    %s151 = sphi 0, %s150
    %s165 = sphi 0, %s151
    %s169 = sphi 0, %s169
    %s171 = sphi 0, %s169
    %s172 = sphi 0, %s171
    %s186 = sphi 0, %s172
    %s190 = sphi 0, %s190
    %s192 = sphi 0, %s190
    %s193 = sphi 0, %s192
    %s207 = sphi 0, %s193
    %s211 = sphi 0, %s211
    %s213 = sphi 0, %s211
    %s214 = sphi 0, %s213
    %s228 = sphi 0, %s214
    %s232 = sphi 0, %s232
    %s234 = sphi 0, %s232
    %s235 = sphi 0, %s234
    %s249 = sphi 0, %s235
    %s253 = sphi 0, %s253
    %s255 = sphi 0, %s253
    %s256 = sphi 0, %s255
    %s270 = sphi 0, %s256
    %s274 = sphi 0, %s274
    %s276 = sphi 0, %s274
    %s277 = sphi 0, %s276
    %s291 = sphi 0, %s277
    %s295 = sphi 0, %s295
    %s297 = sphi 0, %s295
    %s298 = sphi 0, %s297
    %s312 = sphi 0, %s298
    %s316 = sphi 0, %s316
    %s318 = sphi 0, %s316
    %s319 = sphi 0, %s318
    %s333 = sphi 0, %s319
    %s337 = sphi 0, %s337
    %s339 = sphi 0, %s337
    %s340 = sphi 0, %s339
    %s354 = sphi 0, %s340
    %s358 = sphi 0, %s358
    %s360 = sphi 0, %s358
    %s361 = sphi 0, %s360
    %s375 = sphi 0, %s361
    %s379 = sphi 0, %s379
    %s381 = sphi 0, %s379
    %s382 = sphi 0, %s381
    %s396 = sphi 0, %s382
    %s402 = sphi 0, %s404
    %s405 = sphi 0, %s402
    %s406 = sphi 0, %s405
    %s422 = sphi 0, %s406
    %s428 = sphi 0, %s430
    %s431 = sphi 0, %s428
    %s432 = sphi 0, %s431
    %s448 = sphi 0, %s432
  $region4: #{tpu_custom_call.1} parent=0 // loop_header_branch
    %28 = sbr.rel (%p26) target = $region8
  $region5: #{tpu_custom_call.1} parent=0 // loop_body
    %s30 = ssub.s32 %s25, 1
    %s31 = ssub.s32 %s25, 2
    %s32 = sadd.s32 %s25, 1
    %s33 = ssub.s32 %s25, %s32
    %p34 = scmp.eq.s32.totalorder %s33, 0
    %s36 = sadd.s32 %s35, 1
    %s37 = scalar_select %p34, %s35, %s36
    %p40 = pneg %p34
    %p41 = scmp.eq.s32.totalorder %s25, 1
    %p42 = por %p40, %p41
    %p43 = scmp.ne.s32.totalorder %s35, %s38
    %p44 = scmp.eq.s32.totalorder %s25, 0
    %p45 = por %p43, %p44
    %p46 = scmp.ne.s32.totalorder %s35, %s38
    %p47 = scmp.eq.s32.totalorder %s30, 1
    %p48 = por %p46, %p47
    %p49 = scmp.ne.s32.totalorder %s38, %s39
    %p50 = scmp.eq.s32.totalorder %s30, 0
    %p51 = por %p49, %p50
    %p52 = scmp.ne.s32.totalorder %s38, %s39
    %p53 = scmp.eq.s32.totalorder %s31, 1
    %p54 = por %p52, %p53
    %p56 = scmp.ne.s32.totalorder %s39, %s55
    %p57 = scmp.eq.s32.totalorder %s31, 0
    %p58 = por %p56, %p57
    %s60 = sadd.s32 %s59, 1
    %p63 = scmp.eq.s32.totalorder %s25, 1
    %p64 = scmp.ne.s32.totalorder %s59, %s61
    %p65 = scmp.eq.s32.totalorder %s25, 0
    %p66 = por %p64, %p65
    %p67 = scmp.ne.s32.totalorder %s59, %s61
    %p68 = scmp.eq.s32.totalorder %s30, 1
    %p69 = por %p67, %p68
    %p70 = scmp.ne.s32.totalorder %s61, %s62
    %p71 = scmp.eq.s32.totalorder %s30, 0
    %p72 = por %p70, %p71
    %p73 = scmp.ne.s32.totalorder %s61, %s62
    %p74 = scmp.eq.s32.totalorder %s31, 1
    %p75 = por %p73, %p74
    %p77 = scmp.ne.s32.totalorder %s62, %s76
    %p78 = scmp.eq.s32.totalorder %s31, 0
    %p79 = por %p77, %p78
    %s80 = ssub.s32 %s25, %s32
    %p81 = scmp.eq.s32.totalorder %s80, 0
    %s83 = sadd.s32 %s82, 1
    %s84 = scalar_select %p81, %s82, %s83
    %p87 = pneg %p81
    %p88 = scmp.eq.s32.totalorder %s25, 1
    %p89 = por %p87, %p88
    %p90 = scmp.ne.s32.totalorder %s82, %s85
    %p91 = scmp.eq.s32.totalorder %s25, 0
    %p92 = por %p90, %p91
    %p93 = scmp.ne.s32.totalorder %s82, %s85
    %p94 = scmp.eq.s32.totalorder %s30, 1
    %p95 = por %p93, %p94
    %p96 = scmp.ne.s32.totalorder %s85, %s86
    %p97 = scmp.eq.s32.totalorder %s30, 0
    %p98 = por %p96, %p97
    %p99 = scmp.ne.s32.totalorder %s85, %s86
    %p100 = scmp.eq.s32.totalorder %s31, 1
    %p101 = por %p99, %p100
    %p103 = scmp.ne.s32.totalorder %s86, %s102
    %p104 = scmp.eq.s32.totalorder %s31, 0
    %p105 = por %p103, %p104
    %s107 = sadd.s32 %s106, 1
    %p110 = scmp.eq.s32.totalorder %s25, 1
    %p111 = scmp.ne.s32.totalorder %s106, %s108
    %p112 = scmp.eq.s32.totalorder %s25, 0
    %p113 = por %p111, %p112
    %p114 = scmp.ne.s32.totalorder %s106, %s108
    %p115 = scmp.eq.s32.totalorder %s30, 1
    %p116 = por %p114, %p115
    %p117 = scmp.ne.s32.totalorder %s108, %s109
    %p118 = scmp.eq.s32.totalorder %s30, 0
    %p119 = por %p117, %p118
    %p120 = scmp.ne.s32.totalorder %s108, %s109
    %p121 = scmp.eq.s32.totalorder %s31, 1
    %p122 = por %p120, %p121
    %p124 = scmp.ne.s32.totalorder %s109, %s123
    %p125 = scmp.eq.s32.totalorder %s31, 0
    %p126 = por %p124, %p125
    %s128 = sadd.s32 %s127, 1
    %p131 = scmp.eq.s32.totalorder %s25, 1
    %p132 = scmp.ne.s32.totalorder %s127, %s129
    %p133 = scmp.eq.s32.totalorder %s25, 0
    %p134 = por %p132, %p133
    %p135 = scmp.ne.s32.totalorder %s127, %s129
    %p136 = scmp.eq.s32.totalorder %s30, 1
    %p137 = por %p135, %p136
    %p138 = scmp.ne.s32.totalorder %s129, %s130
    %p139 = scmp.eq.s32.totalorder %s30, 0
    %p140 = por %p138, %p139
    %p141 = scmp.ne.s32.totalorder %s129, %s130
    %p142 = scmp.eq.s32.totalorder %s31, 1
    %p143 = por %p141, %p142
    %p145 = scmp.ne.s32.totalorder %s130, %s144
    %p146 = scmp.eq.s32.totalorder %s31, 0
    %p147 = por %p145, %p146
    %s149 = sadd.s32 %s148, 1
    %p152 = scmp.eq.s32.totalorder %s25, 1
    %p153 = scmp.ne.s32.totalorder %s148, %s150
    %p154 = scmp.eq.s32.totalorder %s25, 0
    %p155 = por %p153, %p154
    %p156 = scmp.ne.s32.totalorder %s148, %s150
    %p157 = scmp.eq.s32.totalorder %s30, 1
    %p158 = por %p156, %p157
    %p159 = scmp.ne.s32.totalorder %s150, %s151
    %p160 = scmp.eq.s32.totalorder %s30, 0
    %p161 = por %p159, %p160
    %p162 = scmp.ne.s32.totalorder %s150, %s151
    %p163 = scmp.eq.s32.totalorder %s31, 1
    %p164 = por %p162, %p163
    %p166 = scmp.ne.s32.totalorder %s151, %s165
    %p167 = scmp.eq.s32.totalorder %s31, 0
    %p168 = por %p166, %p167
    %s170 = sadd.s32 %s169, 1
    %p173 = scmp.eq.s32.totalorder %s25, 1
    %p174 = scmp.ne.s32.totalorder %s169, %s171
    %p175 = scmp.eq.s32.totalorder %s25, 0
    %p176 = por %p174, %p175
    %p177 = scmp.ne.s32.totalorder %s169, %s171
    %p178 = scmp.eq.s32.totalorder %s30, 1
    %p179 = por %p177, %p178
    %p180 = scmp.ne.s32.totalorder %s171, %s172
    %p181 = scmp.eq.s32.totalorder %s30, 0
    %p182 = por %p180, %p181
    %p183 = scmp.ne.s32.totalorder %s171, %s172
    %p184 = scmp.eq.s32.totalorder %s31, 1
    %p185 = por %p183, %p184
    %p187 = scmp.ne.s32.totalorder %s172, %s186
    %p188 = scmp.eq.s32.totalorder %s31, 0
    %p189 = por %p187, %p188
    %s191 = sadd.s32 %s190, 1
    %p194 = scmp.eq.s32.totalorder %s25, 1
    %p195 = scmp.ne.s32.totalorder %s190, %s192
    %p196 = scmp.eq.s32.totalorder %s25, 0
    %p197 = por %p195, %p196
    %p198 = scmp.ne.s32.totalorder %s190, %s192
    %p199 = scmp.eq.s32.totalorder %s30, 1
    %p200 = por %p198, %p199
    %p201 = scmp.ne.s32.totalorder %s192, %s193
    %p202 = scmp.eq.s32.totalorder %s30, 0
    %p203 = por %p201, %p202
    %p204 = scmp.ne.s32.totalorder %s192, %s193
    %p205 = scmp.eq.s32.totalorder %s31, 1
    %p206 = por %p204, %p205
    %p208 = scmp.ne.s32.totalorder %s193, %s207
    %p209 = scmp.eq.s32.totalorder %s31, 0
    %p210 = por %p208, %p209
    %s212 = sadd.s32 %s211, 1
    %p215 = scmp.eq.s32.totalorder %s25, 1
    %p216 = scmp.ne.s32.totalorder %s211, %s213
    %p217 = scmp.eq.s32.totalorder %s25, 0
    %p218 = por %p216, %p217
    %p219 = scmp.ne.s32.totalorder %s211, %s213
    %p220 = scmp.eq.s32.totalorder %s30, 1
    %p221 = por %p219, %p220
    %p222 = scmp.ne.s32.totalorder %s213, %s214
    %p223 = scmp.eq.s32.totalorder %s30, 0
    %p224 = por %p222, %p223
    %p225 = scmp.ne.s32.totalorder %s213, %s214
    %p226 = scmp.eq.s32.totalorder %s31, 1
    %p227 = por %p225, %p226
    %p229 = scmp.ne.s32.totalorder %s214, %s228
    %p230 = scmp.eq.s32.totalorder %s31, 0
    %p231 = por %p229, %p230
    %s233 = sadd.s32 %s232, 1
    %p236 = scmp.eq.s32.totalorder %s25, 1
    %p237 = scmp.ne.s32.totalorder %s232, %s234
    %p238 = scmp.eq.s32.totalorder %s25, 0
    %p239 = por %p237, %p238
    %p240 = scmp.ne.s32.totalorder %s232, %s234
    %p241 = scmp.eq.s32.totalorder %s30, 1
    %p242 = por %p240, %p241
    %p243 = scmp.ne.s32.totalorder %s234, %s235
    %p244 = scmp.eq.s32.totalorder %s30, 0
    %p245 = por %p243, %p244
    %p246 = scmp.ne.s32.totalorder %s234, %s235
    %p247 = scmp.eq.s32.totalorder %s31, 1
    %p248 = por %p246, %p247
    %p250 = scmp.ne.s32.totalorder %s235, %s249
    %p251 = scmp.eq.s32.totalorder %s31, 0
    %p252 = por %p250, %p251
    %s254 = sadd.s32 %s253, 1
    %p257 = scmp.eq.s32.totalorder %s25, 1
    %p258 = scmp.ne.s32.totalorder %s253, %s255
    %p259 = scmp.eq.s32.totalorder %s25, 0
    %p260 = por %p258, %p259
    %p261 = scmp.ne.s32.totalorder %s253, %s255
    %p262 = scmp.eq.s32.totalorder %s30, 1
    %p263 = por %p261, %p262
    %p264 = scmp.ne.s32.totalorder %s255, %s256
    %p265 = scmp.eq.s32.totalorder %s30, 0
    %p266 = por %p264, %p265
    %p267 = scmp.ne.s32.totalorder %s255, %s256
    %p268 = scmp.eq.s32.totalorder %s31, 1
    %p269 = por %p267, %p268
    %p271 = scmp.ne.s32.totalorder %s256, %s270
    %p272 = scmp.eq.s32.totalorder %s31, 0
    %p273 = por %p271, %p272
    %s275 = sadd.s32 %s274, 1
    %p278 = scmp.eq.s32.totalorder %s25, 1
    %p279 = scmp.ne.s32.totalorder %s274, %s276
    %p280 = scmp.eq.s32.totalorder %s25, 0
    %p281 = por %p279, %p280
    %p282 = scmp.ne.s32.totalorder %s274, %s276
    %p283 = scmp.eq.s32.totalorder %s30, 1
    %p284 = por %p282, %p283
    %p285 = scmp.ne.s32.totalorder %s276, %s277
    %p286 = scmp.eq.s32.totalorder %s30, 0
    %p287 = por %p285, %p286
    %p288 = scmp.ne.s32.totalorder %s276, %s277
    %p289 = scmp.eq.s32.totalorder %s31, 1
    %p290 = por %p288, %p289
    %p292 = scmp.ne.s32.totalorder %s277, %s291
    %p293 = scmp.eq.s32.totalorder %s31, 0
    %p294 = por %p292, %p293
    %s296 = sadd.s32 %s295, 1
    %p299 = scmp.eq.s32.totalorder %s25, 1
    %p300 = scmp.ne.s32.totalorder %s295, %s297
    %p301 = scmp.eq.s32.totalorder %s25, 0
    %p302 = por %p300, %p301
    %p303 = scmp.ne.s32.totalorder %s295, %s297
    %p304 = scmp.eq.s32.totalorder %s30, 1
    %p305 = por %p303, %p304
    %p306 = scmp.ne.s32.totalorder %s297, %s298
    %p307 = scmp.eq.s32.totalorder %s30, 0
    %p308 = por %p306, %p307
    %p309 = scmp.ne.s32.totalorder %s297, %s298
    %p310 = scmp.eq.s32.totalorder %s31, 1
    %p311 = por %p309, %p310
    %p313 = scmp.ne.s32.totalorder %s298, %s312
    %p314 = scmp.eq.s32.totalorder %s31, 0
    %p315 = por %p313, %p314
    %s317 = sadd.s32 %s316, 1
    %p320 = scmp.eq.s32.totalorder %s25, 1
    %p321 = scmp.ne.s32.totalorder %s316, %s318
    %p322 = scmp.eq.s32.totalorder %s25, 0
    %p323 = por %p321, %p322
    %p324 = scmp.ne.s32.totalorder %s316, %s318
    %p325 = scmp.eq.s32.totalorder %s30, 1
    %p326 = por %p324, %p325
    %p327 = scmp.ne.s32.totalorder %s318, %s319
    %p328 = scmp.eq.s32.totalorder %s30, 0
    %p329 = por %p327, %p328
    %p330 = scmp.ne.s32.totalorder %s318, %s319
    %p331 = scmp.eq.s32.totalorder %s31, 1
    %p332 = por %p330, %p331
    %p334 = scmp.ne.s32.totalorder %s319, %s333
    %p335 = scmp.eq.s32.totalorder %s31, 0
    %p336 = por %p334, %p335
    %s338 = sadd.s32 %s337, 1
    %p341 = scmp.eq.s32.totalorder %s25, 1
    %p342 = scmp.ne.s32.totalorder %s337, %s339
    %p343 = scmp.eq.s32.totalorder %s25, 0
    %p344 = por %p342, %p343
    %p345 = scmp.ne.s32.totalorder %s337, %s339
    %p346 = scmp.eq.s32.totalorder %s30, 1
    %p347 = por %p345, %p346
    %p348 = scmp.ne.s32.totalorder %s339, %s340
    %p349 = scmp.eq.s32.totalorder %s30, 0
    %p350 = por %p348, %p349
    %p351 = scmp.ne.s32.totalorder %s339, %s340
    %p352 = scmp.eq.s32.totalorder %s31, 1
    %p353 = por %p351, %p352
    %p355 = scmp.ne.s32.totalorder %s340, %s354
    %p356 = scmp.eq.s32.totalorder %s31, 0
    %p357 = por %p355, %p356
    %s359 = sadd.s32 %s358, 1
    %p362 = scmp.eq.s32.totalorder %s25, 1
    %p363 = scmp.ne.s32.totalorder %s358, %s360
    %p364 = scmp.eq.s32.totalorder %s25, 0
    %p365 = por %p363, %p364
    %p366 = scmp.ne.s32.totalorder %s358, %s360
    %p367 = scmp.eq.s32.totalorder %s30, 1
    %p368 = por %p366, %p367
    %p369 = scmp.ne.s32.totalorder %s360, %s361
    %p370 = scmp.eq.s32.totalorder %s30, 0
    %p371 = por %p369, %p370
    %p372 = scmp.ne.s32.totalorder %s360, %s361
    %p373 = scmp.eq.s32.totalorder %s31, 1
    %p374 = por %p372, %p373
    %p376 = scmp.ne.s32.totalorder %s361, %s375
    %p377 = scmp.eq.s32.totalorder %s31, 0
    %p378 = por %p376, %p377
    %s380 = sadd.s32 %s379, 1
    %p383 = scmp.eq.s32.totalorder %s25, 1
    %p384 = scmp.ne.s32.totalorder %s379, %s381
    %p385 = scmp.eq.s32.totalorder %s25, 0
    %p386 = por %p384, %p385
    %p387 = scmp.ne.s32.totalorder %s379, %s381
    %p388 = scmp.eq.s32.totalorder %s30, 1
    %p389 = por %p387, %p388
    %p390 = scmp.ne.s32.totalorder %s381, %s382
    %p391 = scmp.eq.s32.totalorder %s30, 0
    %p392 = por %p390, %p391
    %p393 = scmp.ne.s32.totalorder %s381, %s382
    %p394 = scmp.eq.s32.totalorder %s31, 1
    %p395 = por %p393, %p394
    %p397 = scmp.ne.s32.totalorder %s382, %s396
    %p398 = scmp.eq.s32.totalorder %s31, 0
    %p399 = por %p397, %p398
    %s400 = ssub.s32 %s25, %s32
    %p401 = scmp.eq.s32.totalorder %s400, 0
    %s403 = sadd.s32 %s402, 1
    %s404 = scalar_select %p401, %s402, %s403
    %p407 = pneg %p401
    %p408 = scmp.eq.s32.totalorder %s25, 1
    %p409 = por %p407, %p408
    %p410 = scmp.ne.s32.totalorder %s402, %s405
    %p411 = scmp.eq.s32.totalorder %s25, 0
    %p412 = por %p410, %p411
    %p413 = scmp.ne.s32.totalorder %s402, %s405
    %p414 = scmp.eq.s32.totalorder %s30, 1
    %p415 = por %p413, %p414
    %p416 = scmp.ne.s32.totalorder %s405, %s406
    %p417 = scmp.eq.s32.totalorder %s30, 0
    %p418 = por %p416, %p417
    %p419 = scmp.ne.s32.totalorder %s405, %s406
    %p420 = scmp.eq.s32.totalorder %s31, 1
    %p421 = por %p419, %p420
    %p423 = scmp.ne.s32.totalorder %s406, %s422
    %p424 = scmp.eq.s32.totalorder %s31, 0
    %p425 = por %p423, %p424
    %s426 = ssub.s32 %s25, %s32
    %p427 = scmp.eq.s32.totalorder %s426, 0
    %s429 = sadd.s32 %s428, 1
    %s430 = scalar_select %p427, %s428, %s429
    %p433 = pneg %p427
    %p434 = scmp.eq.s32.totalorder %s25, 1
    %p435 = por %p433, %p434
    %p436 = scmp.ne.s32.totalorder %s428, %s431
    %p437 = scmp.eq.s32.totalorder %s25, 0
    %p438 = por %p436, %p437
    %p439 = scmp.ne.s32.totalorder %s428, %s431
    %p440 = scmp.eq.s32.totalorder %s30, 1
    %p441 = por %p439, %p440
    %p442 = scmp.ne.s32.totalorder %s431, %s432
    %p443 = scmp.eq.s32.totalorder %s30, 0
    %p444 = por %p442, %p443
    %p445 = scmp.ne.s32.totalorder %s431, %s432
    %p446 = scmp.eq.s32.totalorder %s31, 1
    %p447 = por %p445, %p446
    %p449 = scmp.ne.s32.totalorder %s432, %s448
    %p450 = scmp.eq.s32.totalorder %s31, 0
    %p451 = por %p449, %p450
    %p452 = scmp.le.s32.totalorder 1, %s25
    %p453 = scmp.lt.s32.totalorder %s25, 3
    %p454 = pnand %p452, %p453
    %p455 = pneg %p454
    // Predicated region
    $region9: #{tpu_custom_call.1} parent=5 // pred_check
      _
    $region10: #{tpu_custom_call.1} parent=5 // pred_check_branch
      %457 = sbr.rel (%p454) target = $region12
    $region11: #{tpu_custom_call.1} parent=5 // pred_region
      %s458 = ssub.s32 %s25, 1
      // Predicated region
      $region13: #{tpu_custom_call.1} parent=11 // pred_check
        %p459 = pneg %p72
      $region14: #{tpu_custom_call.1} parent=11 // pred_check_branch
        %461 = sbr.rel (%p459) target = $region16
      $region15: #{tpu_custom_call.1} parent=11 // pred_region
        _
      $region16: #{tpu_custom_call.1} parent=11 // pred_fallthru
        _
      // Predicated region
      $region17: #{tpu_custom_call.1} parent=11 // pred_check
        %p462 = pneg %p119
      $region18: #{tpu_custom_call.1} parent=11 // pred_check_branch
        %464 = sbr.rel (%p462) target = $region20
      $region19: #{tpu_custom_call.1} parent=11 // pred_region
        _
      $region20: #{tpu_custom_call.1} parent=11 // pred_fallthru
        _
      // Predicated region
      $region21: #{tpu_custom_call.1} parent=11 // pred_check
        %p465 = pneg %p140
      $region22: #{tpu_custom_call.1} parent=11 // pred_check_branch
        %467 = sbr.rel (%p465) target = $region24
      $region23: #{tpu_custom_call.1} parent=11 // pred_region
        _
      $region24: #{tpu_custom_call.1} parent=11 // pred_fallthru
        _
      // Predicated region
      $region25: #{tpu_custom_call.1} parent=11 // pred_check
        %p468 = pneg %p161
      $region26: #{tpu_custom_call.1} parent=11 // pred_check_branch
        %470 = sbr.rel (%p468) target = $region28
      $region27: #{tpu_custom_call.1} parent=11 // pred_region
        _
      $region28: #{tpu_custom_call.1} parent=11 // pred_fallthru
        _
      // Predicated region
      $region29: #{tpu_custom_call.1} parent=11 // pred_check
        %p471 = pneg %p182
      $region30: #{tpu_custom_call.1} parent=11 // pred_check_branch
        %473 = sbr.rel (%p471) target = $region32
      $region31: #{tpu_custom_call.1} parent=11 // pred_region
        _
      $region32: #{tpu_custom_call.1} parent=11 // pred_fallthru
        _
      // Predicated region
      $region33: #{tpu_custom_call.1} parent=11 // pred_check
        %p474 = pneg %p203
      $region34: #{tpu_custom_call.1} parent=11 // pred_check_branch
        %476 = sbr.rel (%p474) target = $region36
      $region35: #{tpu_custom_call.1} parent=11 // pred_region
        _
      $region36: #{tpu_custom_call.1} parent=11 // pred_fallthru
        _
      // Predicated region
      $region37: #{tpu_custom_call.1} parent=11 // pred_check
        %p477 = pneg %p224
      $region38: #{tpu_custom_call.1} parent=11 // pred_check_branch
        %479 = sbr.rel (%p477) target = $region40
      $region39: #{tpu_custom_call.1} parent=11 // pred_region
        _
      $region40: #{tpu_custom_call.1} parent=11 // pred_fallthru
        _
      // Predicated region
      $region41: #{tpu_custom_call.1} parent=11 // pred_check
        %p480 = pneg %p245
      $region42: #{tpu_custom_call.1} parent=11 // pred_check_branch
        %482 = sbr.rel (%p480) target = $region44
      $region43: #{tpu_custom_call.1} parent=11 // pred_region
        _
      $region44: #{tpu_custom_call.1} parent=11 // pred_fallthru
        _
      // Predicated region
      $region45: #{tpu_custom_call.1} parent=11 // pred_check
        %p483 = pneg %p266
      $region46: #{tpu_custom_call.1} parent=11 // pred_check_branch
        %485 = sbr.rel (%p483) target = $region48
      $region47: #{tpu_custom_call.1} parent=11 // pred_region
        _
      $region48: #{tpu_custom_call.1} parent=11 // pred_fallthru
        _
      // Predicated region
      $region49: #{tpu_custom_call.1} parent=11 // pred_check
        %p486 = pneg %p287
      $region50: #{tpu_custom_call.1} parent=11 // pred_check_branch
        %488 = sbr.rel (%p486) target = $region52
      $region51: #{tpu_custom_call.1} parent=11 // pred_region
        _
      $region52: #{tpu_custom_call.1} parent=11 // pred_fallthru
        _
      // Predicated region
      $region53: #{tpu_custom_call.1} parent=11 // pred_check
        %p489 = pneg %p308
      $region54: #{tpu_custom_call.1} parent=11 // pred_check_branch
        %491 = sbr.rel (%p489) target = $region56
      $region55: #{tpu_custom_call.1} parent=11 // pred_region
        _
      $region56: #{tpu_custom_call.1} parent=11 // pred_fallthru
        _
      // Predicated region
      $region57: #{tpu_custom_call.1} parent=11 // pred_check
        %p492 = pneg %p329
      $region58: #{tpu_custom_call.1} parent=11 // pred_check_branch
        %494 = sbr.rel (%p492) target = $region60
      $region59: #{tpu_custom_call.1} parent=11 // pred_region
        _
      $region60: #{tpu_custom_call.1} parent=11 // pred_fallthru
        _
      // Predicated region
      $region61: #{tpu_custom_call.1} parent=11 // pred_check
        %p495 = pneg %p350
      $region62: #{tpu_custom_call.1} parent=11 // pred_check_branch
        %497 = sbr.rel (%p495) target = $region64
      $region63: #{tpu_custom_call.1} parent=11 // pred_region
        _
      $region64: #{tpu_custom_call.1} parent=11 // pred_fallthru
        _
      // Predicated region
      $region65: #{tpu_custom_call.1} parent=11 // pred_check
        %p498 = pneg %p371
      $region66: #{tpu_custom_call.1} parent=11 // pred_check_branch
        %500 = sbr.rel (%p498) target = $region68
      $region67: #{tpu_custom_call.1} parent=11 // pred_region
        _
      $region68: #{tpu_custom_call.1} parent=11 // pred_fallthru
        _
      // Predicated region
      $region69: #{tpu_custom_call.1} parent=11 // pred_check
        %p501 = pneg %p392
      $region70: #{tpu_custom_call.1} parent=11 // pred_check_branch
        %503 = sbr.rel (%p501) target = $region72
      $region71: #{tpu_custom_call.1} parent=11 // pred_region
        _
      $region72: #{tpu_custom_call.1} parent=11 // pred_fallthru
        _
    $region12: #{tpu_custom_call.1} parent=5 // pred_fallthru
      _
    %p504 = scmp.lt.s32.totalorder %s25, 2
    // Predicated region
    $region73: #{tpu_custom_call.1} parent=5 // pred_check
      %p505 = pneg %p504
    $region74: #{tpu_custom_call.1} parent=5 // pred_check_branch
      %507 = sbr.rel (%p505) target = $region76
    $region75: #{tpu_custom_call.1} parent=5 // pred_region
      // Predicated region
      $region77: #{tpu_custom_call.1} parent=75 // pred_check
        %p508 = pneg %p45
      $region78: #{tpu_custom_call.1} parent=75 // pred_check_branch
        %510 = sbr.rel (%p508) target = $region80
      $region79: #{tpu_custom_call.1} parent=75 // pred_region
        %p511 = scmp.lt.s32.totalorder %s25, 1
        %s512 = scalar_select %p511, %s25, 1
        %s513 = smul.addr %s512, 8
        %s514 = smul.addr %s513, 8
        %s515 = scalar_lea.vmem %s0, %s514
      $region80: #{tpu_custom_call.1} parent=75 // pred_fallthru
        _
      // Predicated region
      $region81: #{tpu_custom_call.1} parent=75 // pred_check
        %p516 = pneg %p92
      $region82: #{tpu_custom_call.1} parent=75 // pred_check_branch
        %518 = sbr.rel (%p516) target = $region84
      $region83: #{tpu_custom_call.1} parent=75 // pred_region
        %p519 = scmp.lt.s32.totalorder %s25, 1
        %s520 = scalar_select %p519, %s25, 1
        %s521 = smul.addr %s520, 4
        %s522 = scalar_lea.vmem %s2, %s521
      $region84: #{tpu_custom_call.1} parent=75 // pred_fallthru
        _
    $region76: #{tpu_custom_call.1} parent=5 // pred_fallthru
      _
    %p523 = scmp.le.s32.totalorder 1, %s25
    %p524 = scmp.lt.s32.totalorder %s25, 3
    %p525 = pnand %p523, %p524
    %p526 = pneg %p525
    // Predicated region
    $region85: #{tpu_custom_call.1} parent=5 // pred_check
      _
    $region86: #{tpu_custom_call.1} parent=5 // pred_check_branch
      %528 = sbr.rel (%p525) target = $region88
    $region87: #{tpu_custom_call.1} parent=5 // pred_region
      %s529 = ssub.s32 %s25, 1
      %p530 = scmp.lt.s32.totalorder %s30, 1
      %s531 = scalar_select %p530, %s30, 1
      %s532 = smul.addr %s531, 8
      %s533 = smul.addr %s532, 8
      %s534 = scalar_lea.vmem %s0, %s533
      %p535 = pneg %p51
      %p536 = pneg %p48
      %p537 = pneg %p72
      %p538 = pneg %p69
      %p539 = scmp.lt.s32.totalorder %s30, 1
      %s540 = scalar_select %p539, %s30, 1
      %s541 = smul.addr %s540, 4
      %s542 = scalar_lea.vmem %s2, %s541
      %p543 = pneg %p98
      %p544 = pneg %p95
      %p545 = pneg %p119
      %p546 = pneg %p116
      %p547 = pneg %p140
      %p548 = pneg %p137
      %p549 = pneg %p161
      %p550 = pneg %p158
      %p551 = pneg %p182
      %p552 = pneg %p179
      %p553 = pneg %p203
      %p554 = pneg %p200
      %p555 = pneg %p224
      %p556 = pneg %p221
      %p557 = pneg %p245
      %p558 = pneg %p242
      %p559 = pneg %p266
      %p560 = pneg %p263
      %p561 = pneg %p287
      %p562 = pneg %p284
      %p563 = pneg %p308
      %p564 = pneg %p305
      %p565 = pneg %p329
      %p566 = pneg %p326
      %p567 = pneg %p350
      %p568 = pneg %p347
      %p569 = pneg %p371
      %p570 = pneg %p368
      %p571 = pneg %p392
      %p572 = pneg %p389
      %p573 = pneg %p418
      %p574 = pneg %p415
      %p575 = scmp.lt.s32.totalorder %s30, 1
      %s576 = scalar_select %p575, %s30, 1
      %s577 = smul.addr %s576, 4
      %s578 = scalar_lea.vmem %s17, %s577
      %p579 = pneg %p444
      %p580 = pneg %p441
      %p581 = scmp.lt.s32.totalorder %s30, 1
      %s582 = scalar_select %p581, %s30, 1
      %s583 = smul.addr %s582, 16
      %s584 = smul.addr %s583, 4
      %s585 = scalar_lea.vmem %s18, %s584
      %p586 = scmp.lt.s32.totalorder %s30, 1
      %s587 = scalar_select %p586, %s30, 1
      %s588 = smul.addr %s587, 8
      %s589 = smul.addr %s588, 8
      %s590 = scalar_lea.vmem %s0, %s589
      %p591 = scmp.lt.s32.totalorder %s30, 1
      %s592 = scalar_select %p591, %s30, 1
      %s593 = smul.addr %s592, 4
      %s594 = scalar_lea.vmem %s2, %s593
      %p595 = scmp.lt.s32.totalorder %s30, 1
      %s596 = scalar_select %p595, %s30, 1
      %s597 = smul.addr %s596, 4
      %s598 = scalar_lea.vmem %s17, %s597
      %p599 = scmp.lt.s32.totalorder %s30, 1
      %s600 = scalar_select %p599, %s30, 1
      %s601 = smul.addr %s600, 16
      %s602 = smul.addr %s601, 4
      %s603 = scalar_lea.vmem %s18, %s602
      %v605 = vld [vmem:[%s590] sm:$0xff]
      %v606 = vld [vmem:[%s590 + $0x8] sm:$0xff]
      %v607 = vld [vmem:[%s590 + $0x10] sm:$0xff]
      %v608 = vld [vmem:[%s590 + $0x18] sm:$0xff]
      %v609 = vld [vmem:[%s590 + $0x20] sm:$0xff]
      %v610 = vld [vmem:[%s590 + $0x28] sm:$0xff]
      %v611 = vld [vmem:[%s590 + $0x30] sm:$0xff]
      %v612 = vld [vmem:[%s590 + $0x38] sm:$0xff]
      %v613 = vld [vmem:[%s1] sm:$0xff]
      %v614 = vld [vmem:[%s1 + $0x8] sm:$0xff]
      %v615 = vld [vmem:[%s1 + $0x10] sm:$0xff]
      %v616 = vld [vmem:[%s1 + $0x18] sm:$0xff]
      %v617 = vld [vmem:[%s1 + $0x20] sm:$0xff]
      %v618 = vld [vmem:[%s1 + $0x28] sm:$0xff]
      %v619 = vld [vmem:[%s1 + $0x30] sm:$0xff]
      %v620 = vld [vmem:[%s1 + $0x38] sm:$0xff]
      %v621 = vld [vmem:[%s594] sm:$0x7]
      %v622 = vadd.f32 %v605, %v613
      %v623 = vadd.f32 %v606, %v614
      %v624 = vadd.f32 %v607, %v615
      %v625 = vadd.f32 %v608, %v616
      %v626 = vadd.f32 %v609, %v617
      %v627 = vadd.f32 %v610, %v618
      %v628 = vadd.f32 %v611, %v619
      %v629 = vadd.f32 %v612, %v620
      %v630 = vpack.c.bf16 %v621, %v621
      %v631 = vpack.c.bf16 %v623, %v622
      %v632 = vpack.c.bf16 %v625, %v624
      %v633 = vpack.c.bf16 %v627, %v626
      %v634 = vpack.c.bf16 %v629, %v628
      %vm635 = vcmask 523264
      %v637 = vsel %vm635, %v630, 0
      %639 = vmatprep.subr.bf16.mxu0 0
      %640 = vmatpush1.bf16.msra.mxu0 %v631
      %641 = vmatprep.subr.bf16.mxu0 0
      %642 = vmatpush1.bf16.msra.mxu0 %v632
      %643 = vmatprep.subr.bf16.mxu0 0
      %644 = vmatpush1.bf16.msra.mxu0 %v633
      %645 = vmatprep.subr.bf16.mxu0 0
      %646 = vmatpush1.bf16.msra.mxu0 %v634
      %647 = vmatprep.subr.bf16.mxu0 0
      %648 = vmatpush1.bf16.msra.mxu0 0
      %649 = vmatprep.subr.bf16.mxu0 0
      %650 = vmatpush1.bf16.msra.mxu0 0
      %651 = vmatprep.subr.bf16.mxu0 0
      %652 = vmatpush1.bf16.msra.mxu0 0
      %653 = vmatprep.subr.bf16.mxu0 0
      %654 = vmatpush1.bf16.msra.mxu0 0
      %655 = vmatprep.subr.bf16.mxu0 0
      %656 = vmatpush1.bf16.msra.mxu0 0
      %657 = vmatprep.subr.bf16.mxu0 0
      %658 = vmatpush1.bf16.msra.mxu0 0
      %659 = vmatprep.subr.bf16.mxu0 0
      %660 = vmatpush1.bf16.msra.mxu0 0
      %661 = vmatprep.subr.bf16.mxu0 0
      %662 = vmatpush1.bf16.msra.mxu0 0
      %663 = vmatprep.subr.bf16.mxu0 0
      %664 = vmatpush1.bf16.msra.mxu0 0
      %665 = vmatprep.subr.bf16.mxu0 0
      %666 = vmatpush1.bf16.msra.mxu0 0
      %667 = vmatprep.subr.bf16.mxu0 0
      %668 = vmatpush1.bf16.msra.mxu0 0
      %669 = vmatprep.subr.bf16.mxu0 0
      %670 = vmatpush1.bf16.msra.mxu0 0
      %671 = vmatprep.mubr.bf16.mxu0 0
      %672 = vmatmul.mubr.bf16.gmra.mrb[0].mxu0 %v637
      %v673 = vpop.f32.mrb[0].mxu0
      %v674 = vadd.f32 0.0, %v673
      %v675 = vpop.f32.mrb[0].mxu0
      %v676 = vpop.f32.mrb[0].mxu0
      %v677 = vpop.f32.mrb[0].mxu0
      %678 = vdwg.mxu0
      %v679 = vmul.f32 %v674, 0.125
      %vm680 = vcmask 518144
      %v681 = vsel %vm680, %v679, -inf
      %682 = vmax.xlane.f32.xlu0 %v681
      %v683 = vpop.xlane.xlu0 %682
      %v684 = vsub.f32 %v679, %v683
      %v685 = vmul.f32 %v684, 1.442695
      %v686 = vpow.pop %v685
      %v687 = vsel %vm680, %v686, 0.0
      %688 = vadd.xlane.f32.xlu0 %v687
      %v689 = vpop.xlane.xlu0 %688
      %v690 = vrcp.pop %v689
      %v691 = vmul.f32 %v686, %v690
      %v692 = vpack.c.bf16 %v691, %v691
      %v693 = vpack.c.bf16 %v606, %v605
      %v694 = vpack.c.bf16 %v608, %v607
      %v695 = vpack.c.bf16 %v610, %v609
      %v696 = vpack.c.bf16 %v612, %v611
      %v698 = vsel %vm635, %v692, 0
      %v701 = vsel %vm635, %v693, 0
      %v704 = vsel %vm635, %v694, 0
      %v707 = vsel %vm635, %v695, 0
      %v710 = vsel %vm635, %v696, 0
      %712 = vmatprep.subr.bf16.mxu0 0
      %713 = vmatpush1.bf16.xpose.msra.mxu0 %v701
      %714 = vmatprep.subr.bf16.mxu0 0
      %715 = vmatpush1.bf16.xpose.msra.mxu0 %v704
      %716 = vmatprep.subr.bf16.mxu0 0
      %717 = vmatpush1.bf16.xpose.msra.mxu0 %v707
      %718 = vmatprep.subr.bf16.mxu0 0
      %719 = vmatpush1.bf16.xpose.msra.mxu0 %v710
      %720 = vmatprep.subr.bf16.mxu0 0
      %721 = vmatpush1.bf16.xpose.msra.mxu0 0
      %722 = vmatprep.subr.bf16.mxu0 0
      %723 = vmatpush1.bf16.xpose.msra.mxu0 0
      %724 = vmatprep.subr.bf16.mxu0 0
      %725 = vmatpush1.bf16.xpose.msra.mxu0 0
      %726 = vmatprep.subr.bf16.mxu0 0
      %727 = vmatpush1.bf16.xpose.msra.mxu0 0
      %728 = vmatprep.subr.bf16.mxu0 0
      %729 = vmatpush1.bf16.xpose.msra.mxu0 0
      %730 = vmatprep.subr.bf16.mxu0 0
      %731 = vmatpush1.bf16.xpose.msra.mxu0 0
      %732 = vmatprep.subr.bf16.mxu0 0
      %733 = vmatpush1.bf16.xpose.msra.mxu0 0
      %734 = vmatprep.subr.bf16.mxu0 0
      %735 = vmatpush1.bf16.xpose.msra.mxu0 0
      %736 = vmatprep.subr.bf16.mxu0 0
      %737 = vmatpush1.bf16.xpose.msra.mxu0 0
      %738 = vmatprep.subr.bf16.mxu0 0
      %739 = vmatpush1.bf16.xpose.msra.mxu0 0
      %740 = vmatprep.subr.bf16.mxu0 0
      %741 = vmatpush1.bf16.xpose.msra.mxu0 0
      %742 = vmatprep.subr.bf16.mxu0 0
      %743 = vmatpush1.bf16.xpose.msra.mxu0 0
      %744 = vmatprep.mubr.bf16.mxu0 0
      %745 = vmatmul.mubr.bf16.gmra.mrb[0].mxu0 %v698
      %v746 = vpop.f32.mrb[0].mxu0
      %v747 = vadd.f32 0.0, %v746
      %v748 = vpop.f32.mrb[0].mxu0
      %v749 = vpop.f32.mrb[0].mxu0
      %v750 = vpop.f32.mrb[0].mxu0
      %751 = vdwg.mxu0
      %v752 = vadd.f32 %v621, %v747
      %v753 = vpack.c.bf16 %v752, %v752
      %754 = vxpose.xlu0.c.b16.start [1/8] %v631, 128
      %755 = vxpose.xlu0.c.b16.cont [2/8] %v632, 128
      %756 = vxpose.xlu0.c.b16.cont [3/8] %v633, 128
      %757 = vxpose.xlu0.c.b16.cont [4/8] %v634, 128
      %758 = vxpose.xlu0.c.b16.cont [5/8] 0, 128
      %759 = vxpose.xlu0.c.b16.cont [6/8] 0, 128
      %760 = vxpose.xlu0.c.b16.cont [7/8] 0, 128
      %761 = vxpose.xlu0.c.b16.end [8/8] 0, 128
      %v762 = vpop.trf.xlu0
      %v763 = vpop.trf.xlu0
      %v764 = vpop.trf.xlu0
      %v765 = vpop.trf.xlu0
      %v766 = vpop.trf.xlu0
      %v767 = vpop.trf.xlu0
      %v768 = vpop.trf.xlu0
      %v769 = vpop.trf.xlu0
      %v771 = vsel %vm635, %v762, 0
      %v774 = vsel %vm635, %v763, 0
      %v777 = vsel %vm635, %v764, 0
      %v780 = vsel %vm635, %v765, 0
      %v783 = vsel %vm635, %v753, 0
      %785 = vmatprep.subr.bf16.mxu0 0
      %786 = vmatpush1.bf16.xpose.msra.mxu0 %v783
      %787 = vmatprep.subr.bf16.mxu0 0
      %788 = vmatpush1.bf16.xpose.msra.mxu0 0
      %789 = vmatprep.subr.bf16.mxu0 0
      %790 = vmatpush1.bf16.xpose.msra.mxu0 0
      %791 = vmatprep.subr.bf16.mxu0 0
      %792 = vmatpush1.bf16.xpose.msra.mxu0 0
      %793 = vmatprep.subr.bf16.mxu0 0
      %794 = vmatpush1.bf16.xpose.msra.mxu0 0
      %795 = vmatprep.subr.bf16.mxu0 0
      %796 = vmatpush1.bf16.xpose.msra.mxu0 0
      %797 = vmatprep.subr.bf16.mxu0 0
      %798 = vmatpush1.bf16.xpose.msra.mxu0 0
      %799 = vmatprep.subr.bf16.mxu0 0
      %800 = vmatpush1.bf16.xpose.msra.mxu0 0
      %801 = vmatprep.subr.bf16.mxu0 0
      %802 = vmatpush1.bf16.xpose.msra.mxu0 0
      %803 = vmatprep.subr.bf16.mxu0 0
      %804 = vmatpush1.bf16.xpose.msra.mxu0 0
      %805 = vmatprep.subr.bf16.mxu0 0
      %806 = vmatpush1.bf16.xpose.msra.mxu0 0
      %807 = vmatprep.subr.bf16.mxu0 0
      %808 = vmatpush1.bf16.xpose.msra.mxu0 0
      %809 = vmatprep.subr.bf16.mxu0 0
      %810 = vmatpush1.bf16.xpose.msra.mxu0 0
      %811 = vmatprep.subr.bf16.mxu0 0
      %812 = vmatpush1.bf16.xpose.msra.mxu0 0
      %813 = vmatprep.subr.bf16.mxu0 0
      %814 = vmatpush1.bf16.xpose.msra.mxu0 0
      %815 = vmatprep.subr.bf16.mxu0 0
      %816 = vmatpush1.bf16.xpose.msra.mxu0 0
      %817 = vmatprep.mubr.bf16.mxu0 0
      %818 = vmatmul.mubr.bf16.gmra.mrb[0].mxu0 %v771
      %v819 = vpop.f32.mrb[0].mxu0
      %v820 = vadd.f32 0.0, %v819
      %v821 = vpop.f32.mrb[0].mxu0
      %v822 = vpop.f32.mrb[0].mxu0
      %v823 = vadd.f32 0.0, %v822
      %v824 = vpop.f32.mrb[0].mxu0
      %825 = vmatprep.mubr.bf16.mxu0 0
      %826 = vmatmul.mubr.bf16.gmra.mrb[0].mxu0 %v774
      %v827 = vpop.f32.mrb[0].mxu0
      %v828 = vadd.f32 0.0, %v827
      %v829 = vpop.f32.mrb[0].mxu0
      %v830 = vpop.f32.mrb[0].mxu0
      %v831 = vadd.f32 0.0, %v830
      %v832 = vpop.f32.mrb[0].mxu0
      %833 = vmatprep.mubr.bf16.mxu0 0
      %834 = vmatmul.mubr.bf16.gmra.mrb[0].mxu0 %v777
      %v835 = vpop.f32.mrb[0].mxu0
      %v836 = vadd.f32 0.0, %v835
      %v837 = vpop.f32.mrb[0].mxu0
      %v838 = vpop.f32.mrb[0].mxu0
      %v839 = vadd.f32 0.0, %v838
      %v840 = vpop.f32.mrb[0].mxu0
      %841 = vmatprep.mubr.bf16.mxu0 0
      %842 = vmatmul.mubr.bf16.gmra.mrb[0].mxu0 %v780
      %v843 = vpop.f32.mrb[0].mxu0
      %v844 = vadd.f32 0.0, %v843
      %v845 = vpop.f32.mrb[0].mxu0
      %v846 = vpop.f32.mrb[0].mxu0
      %v847 = vadd.f32 0.0, %v846
      %v848 = vpop.f32.mrb[0].mxu0
      %849 = vdwg.mxu0
      %v850 = vmul.f32 %v820, 0.125
      %v851 = vmul.f32 %v823, 0.125
      %v852 = vmul.f32 %v828, 0.125
      %v853 = vmul.f32 %v831, 0.125
      %v854 = vmul.f32 %v836, 0.125
      %v855 = vmul.f32 %v839, 0.125
      %v856 = vmul.f32 %v844, 0.125
      %v857 = vmul.f32 %v847, 0.125
      %vm858 = vcmask 23552
      %v859 = vsel %vm858, %v850, -inf
      %860 = vmax.xlane.f32.xlu0 %v859
      %v861 = vpop.xlane.xlu0 %860
      %v862 = vsel %vm858, %v851, -inf
      %863 = vmax.xlane.f32.xlu0 %v862
      %v864 = vpop.xlane.xlu0 %863
      %v865 = vsel %vm858, %v852, -inf
      %866 = vmax.xlane.f32.xlu0 %v865
      %v867 = vpop.xlane.xlu0 %866
      %v868 = vsel %vm858, %v853, -inf
      %869 = vmax.xlane.f32.xlu0 %v868
      %v870 = vpop.xlane.xlu0 %869
      %v871 = vsel %vm858, %v854, -inf
      %872 = vmax.xlane.f32.xlu0 %v871
      %v873 = vpop.xlane.xlu0 %872
      %v874 = vsel %vm858, %v855, -inf
      %875 = vmax.xlane.f32.xlu0 %v874
      %v876 = vpop.xlane.xlu0 %875
      %v877 = vsel %vm858, %v856, -inf
      %878 = vmax.xlane.f32.xlu0 %v877
      %v879 = vpop.xlane.xlu0 %878
      %v880 = vsel %vm858, %v857, -inf
      %881 = vmax.xlane.f32.xlu0 %v880
      %v882 = vpop.xlane.xlu0 %881
      %v883 = vsub.f32 %v850, %v861
      %v884 = vsub.f32 %v851, %v864
      %v885 = vsub.f32 %v852, %v867
      %v886 = vsub.f32 %v853, %v870
      %v887 = vsub.f32 %v854, %v873
      %v888 = vsub.f32 %v855, %v876
      %v889 = vsub.f32 %v856, %v879
      %v890 = vsub.f32 %v857, %v882
      %v891 = vmul.f32 %v883, 1.442695
      %v892 = vpow.pop %v891
      %v893 = vmul.f32 %v884, 1.442695
      %v894 = vpow.pop %v893
      %v895 = vmul.f32 %v885, 1.442695
      %v896 = vpow.pop %v895
      %v897 = vmul.f32 %v886, 1.442695
      %v898 = vpow.pop %v897
      %v899 = vmul.f32 %v887, 1.442695
      %v900 = vpow.pop %v899
      %v901 = vmul.f32 %v888, 1.442695
      %v902 = vpow.pop %v901
      %v903 = vmul.f32 %v889, 1.442695
      %v904 = vpow.pop %v903
      %v905 = vmul.f32 %v890, 1.442695
      %v906 = vpow.pop %v905
      %v907 = vsel %vm858, %v892, 0.0
      %908 = vadd.xlane.f32.xlu0 %v907
      %v909 = vpop.xlane.xlu0 %908
      %v910 = vsel %vm858, %v894, 0.0
      %911 = vadd.xlane.f32.xlu0 %v910
      %v912 = vpop.xlane.xlu0 %911
      %v913 = vsel %vm858, %v896, 0.0
      %914 = vadd.xlane.f32.xlu0 %v913
      %v915 = vpop.xlane.xlu0 %914
      %v916 = vsel %vm858, %v898, 0.0
      %917 = vadd.xlane.f32.xlu0 %v916
      %v918 = vpop.xlane.xlu0 %917
      %v919 = vsel %vm858, %v900, 0.0
      %920 = vadd.xlane.f32.xlu0 %v919
      %v921 = vpop.xlane.xlu0 %920
      %v922 = vsel %vm858, %v902, 0.0
      %923 = vadd.xlane.f32.xlu0 %v922
      %v924 = vpop.xlane.xlu0 %923
      %v925 = vsel %vm858, %v904, 0.0
      %926 = vadd.xlane.f32.xlu0 %v925
      %v927 = vpop.xlane.xlu0 %926
      %v928 = vsel %vm858, %v906, 0.0
      %929 = vadd.xlane.f32.xlu0 %v928
      %v930 = vpop.xlane.xlu0 %929
      %v931 = vrcp.pop %v909
      %v932 = vrcp.pop %v912
      %v933 = vrcp.pop %v915
      %v934 = vrcp.pop %v918
      %v935 = vrcp.pop %v921
      %v936 = vrcp.pop %v924
      %v937 = vrcp.pop %v927
      %v938 = vrcp.pop %v930
      %v939 = vmul.f32 %v892, %v931
      %v940 = vmul.f32 %v894, %v932
      %v941 = vmul.f32 %v896, %v933
      %v942 = vmul.f32 %v898, %v934
      %v943 = vmul.f32 %v900, %v935
      %v944 = vmul.f32 %v902, %v936
      %v945 = vmul.f32 %v904, %v937
      %v946 = vmul.f32 %v906, %v938
      %v947 = vpack.c.bf16 %v940, %v939
      %v948 = vpack.c.bf16 %v942, %v941
      %v949 = vpack.c.bf16 %v944, %v943
      %v950 = vpack.c.bf16 %v946, %v945
      %951 = vxpose.xlu0.c.b16.start [1/8] %v753, 128
      %952 = vxpose.xlu0.c.b16.cont [2/8] 0, 128
      %953 = vxpose.xlu0.c.b16.cont [3/8] 0, 128
      %954 = vxpose.xlu0.c.b16.cont [4/8] 0, 128
      %955 = vxpose.xlu0.c.b16.cont [5/8] 0, 128
      %956 = vxpose.xlu0.c.b16.cont [6/8] 0, 128
      %957 = vxpose.xlu0.c.b16.cont [7/8] 0, 128
      %958 = vxpose.xlu0.c.b16.end [8/8] 0, 128
      %v959 = vpop.trf.xlu0
      %v960 = vpop.trf.xlu0
      %v961 = vpop.trf.xlu0
      %v962 = vpop.trf.xlu0
      %v963 = vpop.trf.xlu0
      %v964 = vpop.trf.xlu0
      %v965 = vpop.trf.xlu0
      %v966 = vpop.trf.xlu0
      %v968 = vsel %vm858, %v959, 0
      %v971 = vsel %vm858, %v960, 0
      %v974 = vsel %vm858, %v961, 0
      %v977 = vsel %vm858, %v962, 0
      %v980 = vsel %vm858, %v947, 0
      %v983 = vsel %vm858, %v948, 0
      %v986 = vsel %vm858, %v949, 0
      %v989 = vsel %vm858, %v950, 0
      %991 = vmatprep.subr.bf16.mxu0 0
      %992 = vmatpush1.bf16.xpose.msra.mxu0 %v980
      %993 = vmatprep.subr.bf16.mxu0 0
      %994 = vmatpush1.bf16.xpose.msra.mxu0 %v983
      %995 = vmatprep.subr.bf16.mxu0 0
      %996 = vmatpush1.bf16.xpose.msra.mxu0 %v986
      %997 = vmatprep.subr.bf16.mxu0 0
      %998 = vmatpush1.bf16.xpose.msra.mxu0 %v989
      %999 = vmatprep.subr.bf16.mxu0 0
      %1000 = vmatpush1.bf16.xpose.msra.mxu0 0
      %1001 = vmatprep.subr.bf16.mxu0 0
      %1002 = vmatpush1.bf16.xpose.msra.mxu0 0
      %1003 = vmatprep.subr.bf16.mxu0 0
      %1004 = vmatpush1.bf16.xpose.msra.mxu0 0
      %1005 = vmatprep.subr.bf16.mxu0 0
      %1006 = vmatpush1.bf16.xpose.msra.mxu0 0
      %1007 = vmatprep.subr.bf16.mxu0 0
      %1008 = vmatpush1.bf16.xpose.msra.mxu0 0
      %1009 = vmatprep.subr.bf16.mxu0 0
      %1010 = vmatpush1.bf16.xpose.msra.mxu0 0
      %1011 = vmatprep.subr.bf16.mxu0 0
      %1012 = vmatpush1.bf16.xpose.msra.mxu0 0
      %1013 = vmatprep.subr.bf16.mxu0 0
      %1014 = vmatpush1.bf16.xpose.msra.mxu0 0
      %1015 = vmatprep.subr.bf16.mxu0 0
      %1016 = vmatpush1.bf16.xpose.msra.mxu0 0
      %1017 = vmatprep.subr.bf16.mxu0 0
      %1018 = vmatpush1.bf16.xpose.msra.mxu0 0
      %1019 = vmatprep.subr.bf16.mxu0 0
      %1020 = vmatpush1.bf16.xpose.msra.mxu0 0
      %1021 = vmatprep.subr.bf16.mxu0 0
      %1022 = vmatpush1.bf16.xpose.msra.mxu0 0
      %1023 = vmatprep.mubr.bf16.mxu0 0
      %1024 = vmatmul.mubr.bf16.gmra.mrb[0].mxu0 %v968
      %v1025 = vpop.f32.mrb[0].mxu0
      %v1026 = vadd.f32 0.0, %v1025
      %v1027 = vpop.f32.mrb[0].mxu0
      %v1028 = vpop.f32.mrb[0].mxu0
      %v1029 = vadd.f32 0.0, %v1028
      %v1030 = vpop.f32.mrb[0].mxu0
      %1031 = vmatprep.mubr.bf16.mxu0 0
      %1032 = vmatmul.mubr.bf16.gmra.mrb[0].mxu0 %v971
      %v1033 = vpop.f32.mrb[0].mxu0
      %v1034 = vadd.f32 0.0, %v1033
      %v1035 = vpop.f32.mrb[0].mxu0
      %v1036 = vpop.f32.mrb[0].mxu0
      %v1037 = vadd.f32 0.0, %v1036
      %v1038 = vpop.f32.mrb[0].mxu0
      %1039 = vmatprep.mubr.bf16.mxu0 0
      %1040 = vmatmul.mubr.bf16.gmra.mrb[0].mxu0 %v974
      %v1041 = vpop.f32.mrb[0].mxu0
      %v1042 = vadd.f32 0.0, %v1041
      %v1043 = vpop.f32.mrb[0].mxu0
      %v1044 = vpop.f32.mrb[0].mxu0
      %v1045 = vadd.f32 0.0, %v1044
      %v1046 = vpop.f32.mrb[0].mxu0
      %1047 = vmatprep.mubr.bf16.mxu0 0
      %1048 = vmatmul.mubr.bf16.gmra.mrb[0].mxu0 %v977
      %v1049 = vpop.f32.mrb[0].mxu0
      %v1050 = vadd.f32 0.0, %v1049
      %v1051 = vpop.f32.mrb[0].mxu0
      %v1052 = vpop.f32.mrb[0].mxu0
      %v1053 = vadd.f32 0.0, %v1052
      %v1054 = vpop.f32.mrb[0].mxu0
      %1055 = vdwg.mxu0
      %v1056 = vadd.f32 %v605, %v1026
      %v1057 = vadd.f32 %v606, %v1029
      %v1058 = vadd.f32 %v607, %v1034
      %v1059 = vadd.f32 %v608, %v1037
      %v1060 = vadd.f32 %v609, %v1042
      %v1061 = vadd.f32 %v610, %v1045
      %v1062 = vadd.f32 %v611, %v1050
      %v1063 = vadd.f32 %v612, %v1053
      %v1064 = vld [vmem:[%s3] sm:$0xf]
      %v1065 = vld [vmem:[%s3 + $0x4] sm:$0xf]
      %v1066 = vld [vmem:[%s3 + $0x8] sm:$0xf]
      %v1067 = vld [vmem:[%s3 + $0xc] sm:$0xf]
      %v1068 = vld [vmem:[%s3 + $0x10] sm:$0xf]
      %v1069 = vld [vmem:[%s3 + $0x14] sm:$0xf]
      %v1070 = vld [vmem:[%s3 + $0x18] sm:$0xf]
      %v1071 = vld [vmem:[%s3 + $0x1c] sm:$0xf]
      %v1072 = vld [vmem:[%s4] sm:$0x1]
      %v1074 = vlaneseq
      %v1075 = vshrl.u32 %v1074, 7
      %v1076 = vsub.s32 0, %v1075
      %v1077 = vrot.slane %v1072, %v1076
      %v1087 = vunpack.c.l.b16 %v1064
      %v1088 = vunpack.c.l.b16 %v1065
      %v1089 = vunpack.c.l.b16 %v1066
      %v1090 = vunpack.c.l.b16 %v1067
      %v1091 = vunpack.c.l.b16 %v1068
      %v1092 = vunpack.c.l.b16 %v1069
      %v1093 = vunpack.c.l.b16 %v1070
      %v1094 = vunpack.c.l.b16 %v1071
      %v1095 = vpack.c.b16 %v1088, %v1087
      %v1096 = vpack.c.b16 %v1090, %v1089
      %v1097 = vpack.c.b16 %v1092, %v1091
      %v1098 = vpack.c.b16 %v1094, %v1093
      %1103 = vmatprep.subr.bf16.mxu0 0
      %1104 = vmatpush1.bf16.msra.mxu0 %v1095
      %1105 = vmatprep.subr.bf16.mxu0 0
      %1106 = vmatpush1.bf16.msra.mxu0 %v1096
      %1107 = vmatprep.subr.bf16.mxu0 0
      %1108 = vmatpush1.bf16.msra.mxu0 %v1097
      %1109 = vmatprep.subr.bf16.mxu0 0
      %1110 = vmatpush1.bf16.msra.mxu0 %v1098
      %1111 = vmatprep.subr.bf16.mxu0 0
      %1112 = vmatpush1.bf16.msra.mxu0 0
      %1113 = vmatprep.subr.bf16.mxu0 0
      %1114 = vmatpush1.bf16.msra.mxu0 0
      %1115 = vmatprep.subr.bf16.mxu0 0
      %1116 = vmatpush1.bf16.msra.mxu0 0
      %1117 = vmatprep.subr.bf16.mxu0 0
      %1118 = vmatpush1.bf16.msra.mxu0 0
      %1119 = vmatprep.subr.bf16.mxu0 0
      %1120 = vmatpush1.bf16.msra.mxu0 0
      %1121 = vmatprep.subr.bf16.mxu0 0
      %1122 = vmatpush1.bf16.msra.mxu0 0
      %1123 = vmatprep.subr.bf16.mxu0 0
      %1124 = vmatpush1.bf16.msra.mxu0 0
      %1125 = vmatprep.subr.bf16.mxu0 0
      %1126 = vmatpush1.bf16.msra.mxu0 0
      %1127 = vmatprep.subr.bf16.mxu0 0
      %1128 = vmatpush1.bf16.msra.mxu0 0
      %1129 = vmatprep.subr.bf16.mxu0 0
      %1130 = vmatpush1.bf16.msra.mxu0 0
      %1131 = vmatprep.subr.bf16.mxu0 0
      %1132 = vmatpush1.bf16.msra.mxu0 0
      %1133 = vmatprep.subr.bf16.mxu0 0
      %1134 = vmatpush1.bf16.msra.mxu0 0
      %1135 = vmatprep.mubr.bf16.mxu0 0
      %1136 = vmatmul.mubr.bf16.gmra.mrb[0].mxu0 %v783
      %v1137 = vpop.f32.mrb[0].mxu0
      %v1138 = vadd.f32 %v1077, %v1137
      %v1139 = vpop.f32.mrb[0].mxu0
      %v1140 = vpop.f32.mrb[0].mxu0
      %v1141 = vpop.f32.mrb[0].mxu0
      %1142 = vdwg.mxu0
      %v1143 = vmax.f32 %v1138, 0.0
      %v1144 = vpack.c.bf16 %v1143, %v1143
      %v1145 = vld [vmem:[%s5] sm:$0xf]
      %v1146 = vld [vmem:[%s5 + $0x4] sm:$0xf]
      %v1147 = vld [vmem:[%s5 + $0x8] sm:$0xf]
      %v1148 = vld [vmem:[%s5 + $0xc] sm:$0xf]
      %v1149 = vld [vmem:[%s5 + $0x10] sm:$0xf]
      %v1150 = vld [vmem:[%s5 + $0x14] sm:$0xf]
      %v1151 = vld [vmem:[%s5 + $0x18] sm:$0xf]
      %v1152 = vld [vmem:[%s5 + $0x1c] sm:$0xf]
      %v1153 = vld [vmem:[%s6] sm:$0x1]
      %v1155 = vlaneseq
      %v1156 = vshrl.u32 %v1155, 7
      %v1157 = vsub.s32 0, %v1156
      %v1158 = vrot.slane %v1153, %v1157
      %v1168 = vunpack.c.l.b16 %v1145
      %v1169 = vunpack.c.l.b16 %v1146
      %v1170 = vunpack.c.l.b16 %v1147
      %v1171 = vunpack.c.l.b16 %v1148
      %v1172 = vunpack.c.l.b16 %v1149
      %v1173 = vunpack.c.l.b16 %v1150
      %v1174 = vunpack.c.l.b16 %v1151
      %v1175 = vunpack.c.l.b16 %v1152
      %v1176 = vpack.c.b16 %v1169, %v1168
      %v1177 = vpack.c.b16 %v1171, %v1170
      %v1178 = vpack.c.b16 %v1173, %v1172
      %v1179 = vpack.c.b16 %v1175, %v1174
      %v1185 = vsel %vm635, %v1144, 0
      %1187 = vmatprep.subr.bf16.mxu0 0
      %1188 = vmatpush1.bf16.msra.mxu0 %v1176
      %1189 = vmatprep.subr.bf16.mxu0 0
      %1190 = vmatpush1.bf16.msra.mxu0 %v1177
      %1191 = vmatprep.subr.bf16.mxu0 0
      %1192 = vmatpush1.bf16.msra.mxu0 %v1178
      %1193 = vmatprep.subr.bf16.mxu0 0
      %1194 = vmatpush1.bf16.msra.mxu0 %v1179
      %1195 = vmatprep.subr.bf16.mxu0 0
      %1196 = vmatpush1.bf16.msra.mxu0 0
      %1197 = vmatprep.subr.bf16.mxu0 0
      %1198 = vmatpush1.bf16.msra.mxu0 0
      %1199 = vmatprep.subr.bf16.mxu0 0
      %1200 = vmatpush1.bf16.msra.mxu0 0
      %1201 = vmatprep.subr.bf16.mxu0 0
      %1202 = vmatpush1.bf16.msra.mxu0 0
      %1203 = vmatprep.subr.bf16.mxu0 0
      %1204 = vmatpush1.bf16.msra.mxu0 0
      %1205 = vmatprep.subr.bf16.mxu0 0
      %1206 = vmatpush1.bf16.msra.mxu0 0
      %1207 = vmatprep.subr.bf16.mxu0 0
      %1208 = vmatpush1.bf16.msra.mxu0 0
      %1209 = vmatprep.subr.bf16.mxu0 0
      %1210 = vmatpush1.bf16.msra.mxu0 0
      %1211 = vmatprep.subr.bf16.mxu0 0
      %1212 = vmatpush1.bf16.msra.mxu0 0
      %1213 = vmatprep.subr.bf16.mxu0 0
      %1214 = vmatpush1.bf16.msra.mxu0 0
      %1215 = vmatprep.subr.bf16.mxu0 0
      %1216 = vmatpush1.bf16.msra.mxu0 0
      %1217 = vmatprep.subr.bf16.mxu0 0
      %1218 = vmatpush1.bf16.msra.mxu0 0
      %1219 = vmatprep.mubr.bf16.mxu0 0
      %1220 = vmatmul.mubr.bf16.gmra.mrb[0].mxu0 %v1185
      %v1221 = vpop.f32.mrb[0].mxu0
      %v1222 = vadd.f32 %v1158, %v1221
      %v1223 = vpop.f32.mrb[0].mxu0
      %v1224 = vpop.f32.mrb[0].mxu0
      %v1225 = vpop.f32.mrb[0].mxu0
      %1226 = vdwg.mxu0
      %v1227 = vmax.f32 %v1222, 0.0
      %v1228 = vpack.c.bf16 %v1227, %v1227
      %v1229 = vld [vmem:[%s7] sm:$0xf]
      %v1230 = vld [vmem:[%s7 + $0x4] sm:$0xf]
      %v1231 = vld [vmem:[%s7 + $0x8] sm:$0xf]
      %v1232 = vld [vmem:[%s7 + $0xc] sm:$0xf]
      %v1233 = vld [vmem:[%s7 + $0x10] sm:$0xf]
      %v1234 = vld [vmem:[%s7 + $0x14] sm:$0xf]
      %v1235 = vld [vmem:[%s7 + $0x18] sm:$0xf]
      %v1236 = vld [vmem:[%s7 + $0x1c] sm:$0xf]
      %v1237 = vld [vmem:[%s8] sm:$0x1]
      %v1239 = vlaneseq
      %v1240 = vshrl.u32 %v1239, 7
      %v1241 = vsub.s32 0, %v1240
      %v1242 = vrot.slane %v1237, %v1241
      %v1252 = vunpack.c.l.b16 %v1229
      %v1253 = vunpack.c.l.b16 %v1230
      %v1254 = vunpack.c.l.b16 %v1231
      %v1255 = vunpack.c.l.b16 %v1232
      %v1256 = vunpack.c.l.b16 %v1233
      %v1257 = vunpack.c.l.b16 %v1234
      %v1258 = vunpack.c.l.b16 %v1235
      %v1259 = vunpack.c.l.b16 %v1236
      %v1260 = vpack.c.b16 %v1253, %v1252
      %v1261 = vpack.c.b16 %v1255, %v1254
      %v1262 = vpack.c.b16 %v1257, %v1256
      %v1263 = vpack.c.b16 %v1259, %v1258
      %v1269 = vsel %vm635, %v1228, 0
      %1271 = vmatprep.subr.bf16.mxu0 0
      %1272 = vmatpush1.bf16.msra.mxu0 %v1260
      %1273 = vmatprep.subr.bf16.mxu0 0
      %1274 = vmatpush1.bf16.msra.mxu0 %v1261
      %1275 = vmatprep.subr.bf16.mxu0 0
      %1276 = vmatpush1.bf16.msra.mxu0 %v1262
      %1277 = vmatprep.subr.bf16.mxu0 0
      %1278 = vmatpush1.bf16.msra.mxu0 %v1263
      %1279 = vmatprep.subr.bf16.mxu0 0
      %1280 = vmatpush1.bf16.msra.mxu0 0
      %1281 = vmatprep.subr.bf16.mxu0 0
      %1282 = vmatpush1.bf16.msra.mxu0 0
      %1283 = vmatprep.subr.bf16.mxu0 0
      %1284 = vmatpush1.bf16.msra.mxu0 0
      %1285 = vmatprep.subr.bf16.mxu0 0
      %1286 = vmatpush1.bf16.msra.mxu0 0
      %1287 = vmatprep.subr.bf16.mxu0 0
      %1288 = vmatpush1.bf16.msra.mxu0 0
      %1289 = vmatprep.subr.bf16.mxu0 0
      %1290 = vmatpush1.bf16.msra.mxu0 0
      %1291 = vmatprep.subr.bf16.mxu0 0
      %1292 = vmatpush1.bf16.msra.mxu0 0
      %1293 = vmatprep.subr.bf16.mxu0 0
      %1294 = vmatpush1.bf16.msra.mxu0 0
      %1295 = vmatprep.subr.bf16.mxu0 0
      %1296 = vmatpush1.bf16.msra.mxu0 0
      %1297 = vmatprep.subr.bf16.mxu0 0
      %1298 = vmatpush1.bf16.msra.mxu0 0
      %1299 = vmatprep.subr.bf16.mxu0 0
      %1300 = vmatpush1.bf16.msra.mxu0 0
      %1301 = vmatprep.subr.bf16.mxu0 0
      %1302 = vmatpush1.bf16.msra.mxu0 0
      %1303 = vmatprep.mubr.bf16.mxu0 0
      %1304 = vmatmul.mubr.bf16.gmra.mrb[0].mxu0 %v1269
      %v1305 = vpop.f32.mrb[0].mxu0
      %v1306 = vadd.f32 %v1242, %v1305
      %v1307 = vpop.f32.mrb[0].mxu0
      %v1308 = vpop.f32.mrb[0].mxu0
      %v1309 = vpop.f32.mrb[0].mxu0
      %1310 = vdwg.mxu0
      %v1311 = vpack.c.bf16 %v1306, %v1306
      %v1312 = vld [vmem:[%s9] sm:$0xf]
      %v1313 = vld [vmem:[%s10] sm:$0x1]
      %v1315 = vlaneseq
      %v1316 = vshrl.u32 %v1315, 7
      %v1317 = vsub.s32 0, %v1316
      %v1318 = vrot.slane %v1313, %v1317
      %vm1320 = vcmask 64512
      %v1322 = vsel %vm1320, %v1311, 0
      %vm1324 = vcmask 1043456
      %v1326 = vsel %vm1324, %v1312, 0
      %1328 = vmatprep.subr.bf16.mxu0 0
      %1329 = vmatpush1.bf16.msra.mxu0 %v1326
      %1330 = vmatprep.subr.bf16.mxu0 0
      %1331 = vmatpush1.bf16.msra.mxu0 0
      %1332 = vmatprep.subr.bf16.mxu0 0
      %1333 = vmatpush1.bf16.msra.mxu0 0
      %1334 = vmatprep.subr.bf16.mxu0 0
      %1335 = vmatpush1.bf16.msra.mxu0 0
      %1336 = vmatprep.subr.bf16.mxu0 0
      %1337 = vmatpush1.bf16.msra.mxu0 0
      %1338 = vmatprep.subr.bf16.mxu0 0
      %1339 = vmatpush1.bf16.msra.mxu0 0
      %1340 = vmatprep.subr.bf16.mxu0 0
      %1341 = vmatpush1.bf16.msra.mxu0 0
      %1342 = vmatprep.subr.bf16.mxu0 0
      %1343 = vmatpush1.bf16.msra.mxu0 0
      %1344 = vmatprep.subr.bf16.mxu0 0
      %1345 = vmatpush1.bf16.msra.mxu0 0
      %1346 = vmatprep.subr.bf16.mxu0 0
      %1347 = vmatpush1.bf16.msra.mxu0 0
      %1348 = vmatprep.subr.bf16.mxu0 0
      %1349 = vmatpush1.bf16.msra.mxu0 0
      %1350 = vmatprep.subr.bf16.mxu0 0
      %1351 = vmatpush1.bf16.msra.mxu0 0
      %1352 = vmatprep.subr.bf16.mxu0 0
      %1353 = vmatpush1.bf16.msra.mxu0 0
      %1354 = vmatprep.subr.bf16.mxu0 0
      %1355 = vmatpush1.bf16.msra.mxu0 0
      %1356 = vmatprep.subr.bf16.mxu0 0
      %1357 = vmatpush1.bf16.msra.mxu0 0
      %1358 = vmatprep.subr.bf16.mxu0 0
      %1359 = vmatpush1.bf16.msra.mxu0 0
      %1360 = vmatprep.mubr.bf16.mxu0 0
      %1361 = vmatmul.mubr.bf16.gmra.mrb[0].mxu0 %v1322
      %v1362 = vpop.f32.mrb[0].mxu0
      %v1363 = vadd.f32 %v1318, %v1362
      %v1364 = vpop.f32.mrb[0].mxu0
      %v1365 = vpop.f32.mrb[0].mxu0
      %v1366 = vpop.f32.mrb[0].mxu0
      %1367 = vdwg.mxu0
      %1368 = vst [vmem:[%s598] sm:$0x7] %v1363
      %v1369 = vld [vmem:[%s11] sm:$0xf]
      %v1370 = vld [vmem:[%s11 + $0x4] sm:$0xf]
      %v1371 = vld [vmem:[%s11 + $0x8] sm:$0xf]
      %v1372 = vld [vmem:[%s11 + $0xc] sm:$0xf]
      %v1373 = vld [vmem:[%s11 + $0x10] sm:$0xf]
      %v1374 = vld [vmem:[%s11 + $0x14] sm:$0xf]
      %v1375 = vld [vmem:[%s11 + $0x18] sm:$0xf]
      %v1376 = vld [vmem:[%s11 + $0x1c] sm:$0xf]
      %v1377 = vpack.c.bf16 %v1057, %v1056
      %v1378 = vpack.c.bf16 %v1059, %v1058
      %v1379 = vpack.c.bf16 %v1061, %v1060
      %v1380 = vpack.c.bf16 %v1063, %v1062
      %v1381 = vld [vmem:[%s12] sm:$0xff]
      %v1382 = vld [vmem:[%s12 + $0x8] sm:$0xff]
      %v1383 = vld [vmem:[%s12 + $0x10] sm:$0xff]
      %v1384 = vld [vmem:[%s12 + $0x18] sm:$0xff]
      %v1385 = vld [vmem:[%s12 + $0x20] sm:$0xff]
      %v1386 = vld [vmem:[%s12 + $0x28] sm:$0xff]
      %v1387 = vld [vmem:[%s12 + $0x30] sm:$0xff]
      %v1388 = vld [vmem:[%s12 + $0x38] sm:$0xff]
      %1390 = vset.pattern.permute.xlu0 0
      %1391 = vperm.xlu0 %1390, %v1381
      %v1392 = vpop.permute.xlu0 %1391
      %1395 = vset.pattern.permute.xlu0 0
      %1396 = vperm.xlu0 %1395, %v1382
      %v1397 = vpop.permute.xlu0 %1396
      %1400 = vset.pattern.permute.xlu0 0
      %1401 = vperm.xlu0 %1400, %v1383
      %v1402 = vpop.permute.xlu0 %1401
      %1405 = vset.pattern.permute.xlu0 0
      %1406 = vperm.xlu0 %1405, %v1384
      %v1407 = vpop.permute.xlu0 %1406
      %1410 = vset.pattern.permute.xlu0 0
      %1411 = vperm.xlu0 %1410, %v1385
      %v1412 = vpop.permute.xlu0 %1411
      %1415 = vset.pattern.permute.xlu0 0
      %1416 = vperm.xlu0 %1415, %v1386
      %v1417 = vpop.permute.xlu0 %1416
      %1420 = vset.pattern.permute.xlu0 0
      %1421 = vperm.xlu0 %1420, %v1387
      %v1422 = vpop.permute.xlu0 %1421
      %1425 = vset.pattern.permute.xlu0 0
      %1426 = vperm.xlu0 %1425, %v1388
      %v1427 = vpop.permute.xlu0 %1426
      %v1437 = vunpack.c.l.b16 %v1369
      %v1438 = vunpack.c.l.b16 %v1370
      %v1439 = vunpack.c.l.b16 %v1371
      %v1440 = vunpack.c.l.b16 %v1372
      %v1441 = vunpack.c.l.b16 %v1373
      %v1442 = vunpack.c.l.b16 %v1374
      %v1443 = vunpack.c.l.b16 %v1375
      %v1444 = vunpack.c.l.b16 %v1376
      %v1445 = vpack.c.b16 %v1438, %v1437
      %v1446 = vpack.c.b16 %v1440, %v1439
      %v1447 = vpack.c.b16 %v1442, %v1441
      %v1448 = vpack.c.b16 %v1444, %v1443
      %1453 = vxpose.xlu0.c.b16.start [1/8] %v1445, 128
      %1454 = vxpose.xlu0.c.b16.cont [2/8] %v1446, 128
      %1455 = vxpose.xlu0.c.b16.cont [3/8] %v1447, 128
      %1456 = vxpose.xlu0.c.b16.cont [4/8] %v1448, 128
      %1457 = vxpose.xlu0.c.b16.cont [5/8] 0, 128
      %1458 = vxpose.xlu0.c.b16.cont [6/8] 0, 128
      %1459 = vxpose.xlu0.c.b16.cont [7/8] 0, 128
      %1460 = vxpose.xlu0.c.b16.end [8/8] 0, 128
      %v1461 = vpop.trf.xlu0
      %v1462 = vpop.trf.xlu0
      %v1463 = vpop.trf.xlu0
      %v1464 = vpop.trf.xlu0
      %v1465 = vpop.trf.xlu0
      %v1466 = vpop.trf.xlu0
      %v1467 = vpop.trf.xlu0
      %v1468 = vpop.trf.xlu0
      %v1470 = vsel %vm635, %v1461, 0
      %v1473 = vsel %vm635, %v1462, 0
      %v1476 = vsel %vm635, %v1463, 0
      %v1479 = vsel %vm635, %v1464, 0
      %1481 = vmatprep.subr.bf16.mxu0 0
      %1482 = vmatpush1.bf16.msra.mxu0 %v1377
      %1483 = vmatprep.subr.bf16.mxu0 0
      %1484 = vmatpush1.bf16.msra.mxu0 %v1378
      %1485 = vmatprep.subr.bf16.mxu0 0
      %1486 = vmatpush1.bf16.msra.mxu0 %v1379
      %1487 = vmatprep.subr.bf16.mxu0 0
      %1488 = vmatpush1.bf16.msra.mxu0 %v1380
      %1489 = vmatprep.subr.bf16.mxu0 0
      %1490 = vmatpush1.bf16.msra.mxu0 0
      %1491 = vmatprep.subr.bf16.mxu0 0
      %1492 = vmatpush1.bf16.msra.mxu0 0
      %1493 = vmatprep.subr.bf16.mxu0 0
      %1494 = vmatpush1.bf16.msra.mxu0 0
      %1495 = vmatprep.subr.bf16.mxu0 0
      %1496 = vmatpush1.bf16.msra.mxu0 0
      %1497 = vmatprep.subr.bf16.mxu0 0
      %1498 = vmatpush1.bf16.msra.mxu0 0
      %1499 = vmatprep.subr.bf16.mxu0 0
      %1500 = vmatpush1.bf16.msra.mxu0 0
      %1501 = vmatprep.subr.bf16.mxu0 0
      %1502 = vmatpush1.bf16.msra.mxu0 0
      %1503 = vmatprep.subr.bf16.mxu0 0
      %1504 = vmatpush1.bf16.msra.mxu0 0
      %1505 = vmatprep.subr.bf16.mxu0 0
      %1506 = vmatpush1.bf16.msra.mxu0 0
      %1507 = vmatprep.subr.bf16.mxu0 0
      %1508 = vmatpush1.bf16.msra.mxu0 0
      %1509 = vmatprep.subr.bf16.mxu0 0
      %1510 = vmatpush1.bf16.msra.mxu0 0
      %1511 = vmatprep.subr.bf16.mxu0 0
      %1512 = vmatpush1.bf16.msra.mxu0 0
      %1513 = vmatprep.mubr.bf16.mxu0 0
      %1514 = vmatmul.mubr.bf16.gmra.mrb[0].mxu0 %v1470
      %v1515 = vpop.f32.mrb[0].mxu0
      %v1516 = vadd.f32 %v1392, %v1515
      %v1517 = vpop.f32.mrb[0].mxu0
      %v1518 = vpop.f32.mrb[0].mxu0
      %v1519 = vadd.f32 %v1397, %v1518
      %v1520 = vpop.f32.mrb[0].mxu0
      %1521 = vmatprep.mubr.bf16.mxu0 0
      %1522 = vmatmul.mubr.bf16.gmra.mrb[0].mxu0 %v1473
      %v1523 = vpop.f32.mrb[0].mxu0
      %v1524 = vadd.f32 %v1402, %v1523
      %v1525 = vpop.f32.mrb[0].mxu0
      %v1526 = vpop.f32.mrb[0].mxu0
      %v1527 = vadd.f32 %v1407, %v1526
      %v1528 = vpop.f32.mrb[0].mxu0
      %1529 = vmatprep.mubr.bf16.mxu0 0
      %1530 = vmatmul.mubr.bf16.gmra.mrb[0].mxu0 %v1476
      %v1531 = vpop.f32.mrb[0].mxu0
      %v1532 = vadd.f32 %v1412, %v1531
      %v1533 = vpop.f32.mrb[0].mxu0
      %v1534 = vpop.f32.mrb[0].mxu0
      %v1535 = vadd.f32 %v1417, %v1534
      %v1536 = vpop.f32.mrb[0].mxu0
      %1537 = vmatprep.mubr.bf16.mxu0 0
      %1538 = vmatmul.mubr.bf16.gmra.mrb[0].mxu0 %v1479
      %v1539 = vpop.f32.mrb[0].mxu0
      %v1540 = vadd.f32 %v1422, %v1539
      %v1541 = vpop.f32.mrb[0].mxu0
      %v1542 = vpop.f32.mrb[0].mxu0
      %v1543 = vadd.f32 %v1427, %v1542
      %v1544 = vpop.f32.mrb[0].mxu0
      %1545 = vdwg.mxu0
      %v1546 = vsel %vm635, %v1516, 0.0
      %v1547 = vsel %vm635, %v1519, 0.0
      %v1548 = vadd.f32 %v1546, %v1547
      %v1549 = vrot.slane %v1548, 4
      %v1550 = vadd.f32 %v1548, %v1549
      %v1551 = vrot.slane %v1550, 2
      %v1552 = vadd.f32 %v1550, %v1551
      %v1553 = vrot.slane %v1552, 1
      %v1554 = vadd.f32 %v1552, %v1553
      %v1555 = vrcp.pop 16.0
      %v1556 = vmul.f32 %v1554, %v1555
      %v1557 = vsub.f32 %v1516, %v1556
      %v1558 = vsub.f32 %v1519, %v1556
      %v1559 = vmul.f32 %v1557, %v1557
      %v1560 = vmul.f32 %v1558, %v1558
      %v1561 = vsel %vm635, %v1559, 0.0
      %v1562 = vsel %vm635, %v1560, 0.0
      %v1563 = vadd.f32 %v1561, %v1562
      %v1564 = vrot.slane %v1563, 4
      %v1565 = vadd.f32 %v1563, %v1564
      %v1566 = vrot.slane %v1565, 2
      %v1567 = vadd.f32 %v1565, %v1566
      %v1568 = vrot.slane %v1567, 1
      %v1569 = vadd.f32 %v1567, %v1568
      %v1570 = vmul.f32 %v1569, %v1555
      %v1571 = vadd.f32 %v1570, 1e-06
      %v1572 = vrsqrt.pop %v1571
      %v1573 = vmul.f32 %v1557, %v1572
      %v1574 = vmul.f32 %v1558, %v1572
      %v1575 = vsel %vm635, %v1524, 0.0
      %v1576 = vsel %vm635, %v1527, 0.0
      %v1577 = vadd.f32 %v1575, %v1576
      %v1578 = vrot.slane %v1577, 4
      %v1579 = vadd.f32 %v1577, %v1578
      %v1580 = vrot.slane %v1579, 2
      %v1581 = vadd.f32 %v1579, %v1580
      %v1582 = vrot.slane %v1581, 1
      %v1583 = vadd.f32 %v1581, %v1582
      %v1584 = vmul.f32 %v1583, %v1555
      %v1585 = vsub.f32 %v1524, %v1584
      %v1586 = vsub.f32 %v1527, %v1584
      %v1587 = vmul.f32 %v1585, %v1585
      %v1588 = vmul.f32 %v1586, %v1586
      %v1589 = vsel %vm635, %v1587, 0.0
      %v1590 = vsel %vm635, %v1588, 0.0
      %v1591 = vadd.f32 %v1589, %v1590
      %v1592 = vrot.slane %v1591, 4
      %v1593 = vadd.f32 %v1591, %v1592
      %v1594 = vrot.slane %v1593, 2
      %v1595 = vadd.f32 %v1593, %v1594
      %v1596 = vrot.slane %v1595, 1
      %v1597 = vadd.f32 %v1595, %v1596
      %v1598 = vmul.f32 %v1597, %v1555
      %v1599 = vadd.f32 %v1598, 1e-06
      %v1600 = vrsqrt.pop %v1599
      %v1601 = vmul.f32 %v1585, %v1600
      %v1602 = vmul.f32 %v1586, %v1600
      %v1603 = vsel %vm635, %v1532, 0.0
      %v1604 = vsel %vm635, %v1535, 0.0
      %v1605 = vadd.f32 %v1603, %v1604
      %v1606 = vrot.slane %v1605, 4
      %v1607 = vadd.f32 %v1605, %v1606
      %v1608 = vrot.slane %v1607, 2
      %v1609 = vadd.f32 %v1607, %v1608
      %v1610 = vrot.slane %v1609, 1
      %v1611 = vadd.f32 %v1609, %v1610
      %v1612 = vmul.f32 %v1611, %v1555
      %v1613 = vsub.f32 %v1532, %v1612
      %v1614 = vsub.f32 %v1535, %v1612
      %v1615 = vmul.f32 %v1613, %v1613
      %v1616 = vmul.f32 %v1614, %v1614
      %v1617 = vsel %vm635, %v1615, 0.0
      %v1618 = vsel %vm635, %v1616, 0.0
      %v1619 = vadd.f32 %v1617, %v1618
      %v1620 = vrot.slane %v1619, 4
      %v1621 = vadd.f32 %v1619, %v1620
      %v1622 = vrot.slane %v1621, 2
      %v1623 = vadd.f32 %v1621, %v1622
      %v1624 = vrot.slane %v1623, 1
      %v1625 = vadd.f32 %v1623, %v1624
      %v1626 = vmul.f32 %v1625, %v1555
      %v1627 = vadd.f32 %v1626, 1e-06
      %v1628 = vrsqrt.pop %v1627
      %v1629 = vmul.f32 %v1613, %v1628
      %v1630 = vmul.f32 %v1614, %v1628
      %v1631 = vsel %vm635, %v1540, 0.0
      %v1632 = vsel %vm635, %v1543, 0.0
      %v1633 = vadd.f32 %v1631, %v1632
      %v1634 = vrot.slane %v1633, 4
      %v1635 = vadd.f32 %v1633, %v1634
      %v1636 = vrot.slane %v1635, 2
      %v1637 = vadd.f32 %v1635, %v1636
      %v1638 = vrot.slane %v1637, 1
      %v1639 = vadd.f32 %v1637, %v1638
      %v1640 = vmul.f32 %v1639, %v1555
      %v1641 = vsub.f32 %v1540, %v1640
      %v1642 = vsub.f32 %v1543, %v1640
      %v1643 = vmul.f32 %v1641, %v1641
      %v1644 = vmul.f32 %v1642, %v1642
      %v1645 = vsel %vm635, %v1643, 0.0
      %v1646 = vsel %vm635, %v1644, 0.0
      %v1647 = vadd.f32 %v1645, %v1646
      %v1648 = vrot.slane %v1647, 4
      %v1649 = vadd.f32 %v1647, %v1648
      %v1650 = vrot.slane %v1649, 2
      %v1651 = vadd.f32 %v1649, %v1650
      %v1652 = vrot.slane %v1651, 1
      %v1653 = vadd.f32 %v1651, %v1652
      %v1654 = vmul.f32 %v1653, %v1555
      %v1655 = vadd.f32 %v1654, 1e-06
      %v1656 = vrsqrt.pop %v1655
      %v1657 = vmul.f32 %v1641, %v1656
      %v1658 = vmul.f32 %v1642, %v1656
      %v1659 = vld [vmem:[%s13] sm:$0xff]
      %v1660 = vld [vmem:[%s13 + $0x8] sm:$0xff]
      %v1661 = vld [vmem:[%s13 + $0x10] sm:$0xff]
      %v1662 = vld [vmem:[%s13 + $0x18] sm:$0xff]
      %v1663 = vld [vmem:[%s13 + $0x20] sm:$0xff]
      %v1664 = vld [vmem:[%s13 + $0x28] sm:$0xff]
      %v1665 = vld [vmem:[%s13 + $0x30] sm:$0xff]
      %v1666 = vld [vmem:[%s13 + $0x38] sm:$0xff]
      %1668 = vset.pattern.permute.xlu0 0
      %1669 = vperm.xlu0 %1668, %v1659
      %v1670 = vpop.permute.xlu0 %1669
      %1673 = vset.pattern.permute.xlu0 0
      %1674 = vperm.xlu0 %1673, %v1660
      %v1675 = vpop.permute.xlu0 %1674
      %1678 = vset.pattern.permute.xlu0 0
      %1679 = vperm.xlu0 %1678, %v1661
      %v1680 = vpop.permute.xlu0 %1679
      %1683 = vset.pattern.permute.xlu0 0
      %1684 = vperm.xlu0 %1683, %v1662
      %v1685 = vpop.permute.xlu0 %1684
      %1688 = vset.pattern.permute.xlu0 0
      %1689 = vperm.xlu0 %1688, %v1663
      %v1690 = vpop.permute.xlu0 %1689
      %1693 = vset.pattern.permute.xlu0 0
      %1694 = vperm.xlu0 %1693, %v1664
      %v1695 = vpop.permute.xlu0 %1694
      %1698 = vset.pattern.permute.xlu0 0
      %1699 = vperm.xlu0 %1698, %v1665
      %v1700 = vpop.permute.xlu0 %1699
      %1703 = vset.pattern.permute.xlu0 0
      %1704 = vperm.xlu0 %1703, %v1666
      %v1705 = vpop.permute.xlu0 %1704
      %v1707 = vmul.f32 %v1573, %v1670
      %v1708 = vmul.f32 %v1574, %v1675
      %v1709 = vmul.f32 %v1601, %v1680
      %v1710 = vmul.f32 %v1602, %v1685
      %v1711 = vmul.f32 %v1629, %v1690
      %v1712 = vmul.f32 %v1630, %v1695
      %v1713 = vmul.f32 %v1657, %v1700
      %v1714 = vmul.f32 %v1658, %v1705
      %v1715 = vld [vmem:[%s14] sm:$0xff]
      %v1716 = vld [vmem:[%s14 + $0x8] sm:$0xff]
      %v1717 = vld [vmem:[%s14 + $0x10] sm:$0xff]
      %v1718 = vld [vmem:[%s14 + $0x18] sm:$0xff]
      %v1719 = vld [vmem:[%s14 + $0x20] sm:$0xff]
      %v1720 = vld [vmem:[%s14 + $0x28] sm:$0xff]
      %v1721 = vld [vmem:[%s14 + $0x30] sm:$0xff]
      %v1722 = vld [vmem:[%s14 + $0x38] sm:$0xff]
      %1724 = vset.pattern.permute.xlu0 0
      %1725 = vperm.xlu0 %1724, %v1715
      %v1726 = vpop.permute.xlu0 %1725
      %1729 = vset.pattern.permute.xlu0 0
      %1730 = vperm.xlu0 %1729, %v1716
      %v1731 = vpop.permute.xlu0 %1730
      %1734 = vset.pattern.permute.xlu0 0
      %1735 = vperm.xlu0 %1734, %v1717
      %v1736 = vpop.permute.xlu0 %1735
      %1739 = vset.pattern.permute.xlu0 0
      %1740 = vperm.xlu0 %1739, %v1718
      %v1741 = vpop.permute.xlu0 %1740
      %1744 = vset.pattern.permute.xlu0 0
      %1745 = vperm.xlu0 %1744, %v1719
      %v1746 = vpop.permute.xlu0 %1745
      %1749 = vset.pattern.permute.xlu0 0
      %1750 = vperm.xlu0 %1749, %v1720
      %v1751 = vpop.permute.xlu0 %1750
      %1754 = vset.pattern.permute.xlu0 0
      %1755 = vperm.xlu0 %1754, %v1721
      %v1756 = vpop.permute.xlu0 %1755
      %1759 = vset.pattern.permute.xlu0 0
      %1760 = vperm.xlu0 %1759, %v1722
      %v1761 = vpop.permute.xlu0 %1760
      %v1763 = vadd.f32 %v1707, %v1726
      %v1764 = vadd.f32 %v1708, %v1731
      %v1765 = vadd.f32 %v1709, %v1736
      %v1766 = vadd.f32 %v1710, %v1741
      %v1767 = vadd.f32 %v1711, %v1746
      %v1768 = vadd.f32 %v1712, %v1751
      %v1769 = vadd.f32 %v1713, %v1756
      %v1770 = vadd.f32 %v1714, %v1761
      %v1771 = vmul.f32 %v1763, 0.5
      %v1772 = vmul.f32 %v1764, 0.5
      %v1773 = vmul.f32 %v1765, 0.5
      %v1774 = vmul.f32 %v1766, 0.5
      %v1775 = vmul.f32 %v1767, 0.5
      %v1776 = vmul.f32 %v1768, 0.5
      %v1777 = vmul.f32 %v1769, 0.5
      %v1778 = vmul.f32 %v1770, 0.5
      %v1779 = vmul.f32 %v1763, 0.70710677
      %v1780 = vmul.f32 %v1764, 0.70710677
      %v1781 = vmul.f32 %v1765, 0.70710677
      %v1782 = vmul.f32 %v1766, 0.70710677
      %v1783 = vmul.f32 %v1767, 0.70710677
      %v1784 = vmul.f32 %v1768, 0.70710677
      %v1785 = vmul.f32 %v1769, 0.70710677
      %v1786 = vmul.f32 %v1770, 0.70710677
      %v1787 = verf.f32.pop %v1779
      %v1788 = verf.f32.pop %v1780
      %v1789 = verf.f32.pop %v1781
      %v1790 = verf.f32.pop %v1782
      %v1791 = verf.f32.pop %v1783
      %v1792 = verf.f32.pop %v1784
      %v1793 = verf.f32.pop %v1785
      %v1794 = verf.f32.pop %v1786
      %v1795 = vadd.f32 %v1787, 1.0
      %v1796 = vadd.f32 %v1788, 1.0
      %v1797 = vadd.f32 %v1789, 1.0
      %v1798 = vadd.f32 %v1790, 1.0
      %v1799 = vadd.f32 %v1791, 1.0
      %v1800 = vadd.f32 %v1792, 1.0
      %v1801 = vadd.f32 %v1793, 1.0
      %v1802 = vadd.f32 %v1794, 1.0
      %v1803 = vmul.f32 %v1771, %v1795
      %v1804 = vmul.f32 %v1772, %v1796
      %v1805 = vmul.f32 %v1773, %v1797
      %v1806 = vmul.f32 %v1774, %v1798
      %v1807 = vmul.f32 %v1775, %v1799
      %v1808 = vmul.f32 %v1776, %v1800
      %v1809 = vmul.f32 %v1777, %v1801
      %v1810 = vmul.f32 %v1778, %v1802
      %v1811 = vld [vmem:[%s15] sm:$0xf]
      %v1812 = vld [vmem:[%s15 + $0x4] sm:$0xf]
      %v1813 = vld [vmem:[%s15 + $0x8] sm:$0xf]
      %v1814 = vld [vmem:[%s15 + $0xc] sm:$0xf]
      %v1815 = vld [vmem:[%s15 + $0x10] sm:$0xf]
      %v1816 = vld [vmem:[%s15 + $0x14] sm:$0xf]
      %v1817 = vld [vmem:[%s15 + $0x18] sm:$0xf]
      %v1818 = vld [vmem:[%s15 + $0x1c] sm:$0xf]
      %v1819 = vpack.c.bf16 %v1804, %v1803
      %v1820 = vpack.c.bf16 %v1806, %v1805
      %v1821 = vpack.c.bf16 %v1808, %v1807
      %v1822 = vpack.c.bf16 %v1810, %v1809
      %v1823 = vld [vmem:[%s16] sm:$0xff]
      %v1824 = vld [vmem:[%s16 + $0x8] sm:$0xff]
      %v1825 = vld [vmem:[%s16 + $0x10] sm:$0xff]
      %v1826 = vld [vmem:[%s16 + $0x18] sm:$0xff]
      %v1827 = vld [vmem:[%s16 + $0x20] sm:$0xff]
      %v1828 = vld [vmem:[%s16 + $0x28] sm:$0xff]
      %v1829 = vld [vmem:[%s16 + $0x30] sm:$0xff]
      %v1830 = vld [vmem:[%s16 + $0x38] sm:$0xff]
      %v1831 = vld [vmem:[%s16 + $0x40] sm:$0xff]
      %v1832 = vld [vmem:[%s16 + $0x48] sm:$0xff]
      %v1833 = vld [vmem:[%s16 + $0x50] sm:$0xff]
      %v1834 = vld [vmem:[%s16 + $0x58] sm:$0xff]
      %v1835 = vld [vmem:[%s16 + $0x60] sm:$0xff]
      %v1836 = vld [vmem:[%s16 + $0x68] sm:$0xff]
      %v1837 = vld [vmem:[%s16 + $0x70] sm:$0xff]
      %v1838 = vld [vmem:[%s16 + $0x78] sm:$0xff]
      %1840 = vset.pattern.permute.xlu0 0
      %1841 = vperm.xlu0 %1840, %v1823
      %v1842 = vpop.permute.xlu0 %1841
      %1845 = vset.pattern.permute.xlu0 0
      %1846 = vperm.xlu0 %1845, %v1824
      %v1847 = vpop.permute.xlu0 %1846
      %1850 = vset.pattern.permute.xlu0 0
      %1851 = vperm.xlu0 %1850, %v1825
      %v1852 = vpop.permute.xlu0 %1851
      %1855 = vset.pattern.permute.xlu0 0
      %1856 = vperm.xlu0 %1855, %v1826
      %v1857 = vpop.permute.xlu0 %1856
      %1860 = vset.pattern.permute.xlu0 0
      %1861 = vperm.xlu0 %1860, %v1827
      %v1862 = vpop.permute.xlu0 %1861
      %1865 = vset.pattern.permute.xlu0 0
      %1866 = vperm.xlu0 %1865, %v1828
      %v1867 = vpop.permute.xlu0 %1866
      %1870 = vset.pattern.permute.xlu0 0
      %1871 = vperm.xlu0 %1870, %v1829
      %v1872 = vpop.permute.xlu0 %1871
      %1875 = vset.pattern.permute.xlu0 0
      %1876 = vperm.xlu0 %1875, %v1830
      %v1877 = vpop.permute.xlu0 %1876
      %1880 = vset.pattern.permute.xlu0 0
      %1881 = vperm.xlu0 %1880, %v1831
      %v1882 = vpop.permute.xlu0 %1881
      %1885 = vset.pattern.permute.xlu0 0
      %1886 = vperm.xlu0 %1885, %v1832
      %v1887 = vpop.permute.xlu0 %1886
      %1890 = vset.pattern.permute.xlu0 0
      %1891 = vperm.xlu0 %1890, %v1833
      %v1892 = vpop.permute.xlu0 %1891
      %1895 = vset.pattern.permute.xlu0 0
      %1896 = vperm.xlu0 %1895, %v1834
      %v1897 = vpop.permute.xlu0 %1896
      %1900 = vset.pattern.permute.xlu0 0
      %1901 = vperm.xlu0 %1900, %v1835
      %v1902 = vpop.permute.xlu0 %1901
      %1905 = vset.pattern.permute.xlu0 0
      %1906 = vperm.xlu0 %1905, %v1836
      %v1907 = vpop.permute.xlu0 %1906
      %1910 = vset.pattern.permute.xlu0 0
      %1911 = vperm.xlu0 %1910, %v1837
      %v1912 = vpop.permute.xlu0 %1911
      %1915 = vset.pattern.permute.xlu0 0
      %1916 = vperm.xlu0 %1915, %v1838
      %v1917 = vpop.permute.xlu0 %1916
      %v1927 = vunpack.c.l.b16 %v1811
      %v1928 = vunpack.c.l.b16 %v1812
      %v1929 = vunpack.c.l.b16 %v1813
      %v1930 = vunpack.c.l.b16 %v1814
      %v1931 = vunpack.c.l.b16 %v1815
      %v1932 = vunpack.c.l.b16 %v1816
      %v1933 = vunpack.c.l.b16 %v1817
      %v1934 = vunpack.c.l.b16 %v1818
      %v1935 = vpack.c.b16 %v1928, %v1927
      %v1936 = vpack.c.b16 %v1930, %v1929
      %v1937 = vpack.c.b16 %v1932, %v1931
      %v1938 = vpack.c.b16 %v1934, %v1933
      %1943 = vxpose.xlu0.c.b16.start [1/8] %v1935, 128
      %1944 = vxpose.xlu0.c.b16.cont [2/8] %v1936, 128
      %1945 = vxpose.xlu0.c.b16.cont [3/8] %v1937, 128
      %1946 = vxpose.xlu0.c.b16.cont [4/8] %v1938, 128
      %1947 = vxpose.xlu0.c.b16.cont [5/8] 0, 128
      %1948 = vxpose.xlu0.c.b16.cont [6/8] 0, 128
      %1949 = vxpose.xlu0.c.b16.cont [7/8] 0, 128
      %1950 = vxpose.xlu0.c.b16.end [8/8] 0, 128
      %v1951 = vpop.trf.xlu0
      %v1952 = vpop.trf.xlu0
      %v1953 = vpop.trf.xlu0
      %v1954 = vpop.trf.xlu0
      %v1955 = vpop.trf.xlu0
      %v1956 = vpop.trf.xlu0
      %v1957 = vpop.trf.xlu0
      %v1958 = vpop.trf.xlu0
      %v1960 = vsel %vm635, %v1951, 0
      %v1963 = vsel %vm635, %v1952, 0
      %v1966 = vsel %vm635, %v1953, 0
      %v1969 = vsel %vm635, %v1954, 0
      %v1972 = vsel %vm635, %v1955, 0
      %v1975 = vsel %vm635, %v1956, 0
      %v1978 = vsel %vm635, %v1957, 0
      %v1981 = vsel %vm635, %v1958, 0
      %1983 = vmatprep.subr.bf16.mxu0 0
      %1984 = vmatpush1.bf16.msra.mxu0 %v1819
      %1985 = vmatprep.subr.bf16.mxu0 0
      %1986 = vmatpush1.bf16.msra.mxu0 %v1820
      %1987 = vmatprep.subr.bf16.mxu0 0
      %1988 = vmatpush1.bf16.msra.mxu0 %v1821
      %1989 = vmatprep.subr.bf16.mxu0 0
      %1990 = vmatpush1.bf16.msra.mxu0 %v1822
      %1991 = vmatprep.subr.bf16.mxu0 0
      %1992 = vmatpush1.bf16.msra.mxu0 0
      %1993 = vmatprep.subr.bf16.mxu0 0
      %1994 = vmatpush1.bf16.msra.mxu0 0
      %1995 = vmatprep.subr.bf16.mxu0 0
      %1996 = vmatpush1.bf16.msra.mxu0 0
      %1997 = vmatprep.subr.bf16.mxu0 0
      %1998 = vmatpush1.bf16.msra.mxu0 0
      %1999 = vmatprep.subr.bf16.mxu0 0
      %2000 = vmatpush1.bf16.msra.mxu0 0
      %2001 = vmatprep.subr.bf16.mxu0 0
      %2002 = vmatpush1.bf16.msra.mxu0 0
      %2003 = vmatprep.subr.bf16.mxu0 0
      %2004 = vmatpush1.bf16.msra.mxu0 0
      %2005 = vmatprep.subr.bf16.mxu0 0
      %2006 = vmatpush1.bf16.msra.mxu0 0
      %2007 = vmatprep.subr.bf16.mxu0 0
      %2008 = vmatpush1.bf16.msra.mxu0 0
      %2009 = vmatprep.subr.bf16.mxu0 0
      %2010 = vmatpush1.bf16.msra.mxu0 0
      %2011 = vmatprep.subr.bf16.mxu0 0
      %2012 = vmatpush1.bf16.msra.mxu0 0
      %2013 = vmatprep.subr.bf16.mxu0 0
      %2014 = vmatpush1.bf16.msra.mxu0 0
      %2015 = vmatprep.mubr.bf16.mxu0 0
      %2016 = vmatmul.mubr.bf16.gmra.mrb[0].mxu0 %v1960
      %v2017 = vpop.f32.mrb[0].mxu0
      %v2018 = vadd.f32 %v1842, %v2017
      %v2019 = vpop.f32.mrb[0].mxu0
      %v2020 = vpop.f32.mrb[0].mxu0
      %v2021 = vadd.f32 %v1847, %v2020
      %v2022 = vpop.f32.mrb[0].mxu0
      %2023 = vmatprep.mubr.bf16.mxu0 0
      %2024 = vmatmul.mubr.bf16.gmra.mrb[0].mxu0 %v1963
      %v2025 = vpop.f32.mrb[0].mxu0
      %v2026 = vadd.f32 %v1852, %v2025
      %v2027 = vpop.f32.mrb[0].mxu0
      %v2028 = vpop.f32.mrb[0].mxu0
      %v2029 = vadd.f32 %v1857, %v2028
      %v2030 = vpop.f32.mrb[0].mxu0
      %2031 = vmatprep.mubr.bf16.mxu0 0
      %2032 = vmatmul.mubr.bf16.gmra.mrb[0].mxu0 %v1966
      %v2033 = vpop.f32.mrb[0].mxu0
      %v2034 = vadd.f32 %v1862, %v2033
      %v2035 = vpop.f32.mrb[0].mxu0
      %v2036 = vpop.f32.mrb[0].mxu0
      %v2037 = vadd.f32 %v1867, %v2036
      %v2038 = vpop.f32.mrb[0].mxu0
      %2039 = vmatprep.mubr.bf16.mxu0 0
      %2040 = vmatmul.mubr.bf16.gmra.mrb[0].mxu0 %v1969
      %v2041 = vpop.f32.mrb[0].mxu0
      %v2042 = vadd.f32 %v1872, %v2041
      %v2043 = vpop.f32.mrb[0].mxu0
      %v2044 = vpop.f32.mrb[0].mxu0
      %v2045 = vadd.f32 %v1877, %v2044
      %v2046 = vpop.f32.mrb[0].mxu0
      %2047 = vmatprep.mubr.bf16.mxu0 0
      %2048 = vmatmul.mubr.bf16.gmra.mrb[0].mxu0 %v1972
      %v2049 = vpop.f32.mrb[0].mxu0
      %v2050 = vadd.f32 %v1882, %v2049
      %v2051 = vpop.f32.mrb[0].mxu0
      %v2052 = vpop.f32.mrb[0].mxu0
      %v2053 = vadd.f32 %v1887, %v2052
      %v2054 = vpop.f32.mrb[0].mxu0
      %2055 = vmatprep.mubr.bf16.mxu0 0
      %2056 = vmatmul.mubr.bf16.gmra.mrb[0].mxu0 %v1975
      %v2057 = vpop.f32.mrb[0].mxu0
      %v2058 = vadd.f32 %v1892, %v2057
      %v2059 = vpop.f32.mrb[0].mxu0
      %v2060 = vpop.f32.mrb[0].mxu0
      %v2061 = vadd.f32 %v1897, %v2060
      %v2062 = vpop.f32.mrb[0].mxu0
      %2063 = vmatprep.mubr.bf16.mxu0 0
      %2064 = vmatmul.mubr.bf16.gmra.mrb[0].mxu0 %v1978
      %v2065 = vpop.f32.mrb[0].mxu0
      %v2066 = vadd.f32 %v1902, %v2065
      %v2067 = vpop.f32.mrb[0].mxu0
      %v2068 = vpop.f32.mrb[0].mxu0
      %v2069 = vadd.f32 %v1907, %v2068
      %v2070 = vpop.f32.mrb[0].mxu0
      %2071 = vmatprep.mubr.bf16.mxu0 0
      %2072 = vmatmul.mubr.bf16.gmra.mrb[0].mxu0 %v1981
      %v2073 = vpop.f32.mrb[0].mxu0
      %v2074 = vadd.f32 %v1912, %v2073
      %v2075 = vpop.f32.mrb[0].mxu0
      %v2076 = vpop.f32.mrb[0].mxu0
      %v2077 = vadd.f32 %v1917, %v2076
      %v2078 = vpop.f32.mrb[0].mxu0
      %2079 = vdwg.mxu0
      %v2080 = vpack.c.bf16 %v2021, %v2018
      %v2081 = vpack.c.bf16 %v2029, %v2026
      %v2082 = vpack.c.bf16 %v2037, %v2034
      %v2083 = vpack.c.bf16 %v2045, %v2042
      %v2084 = vpack.c.bf16 %v2053, %v2050
      %v2085 = vpack.c.bf16 %v2061, %v2058
      %v2086 = vpack.c.bf16 %v2069, %v2066
      %v2087 = vpack.c.bf16 %v2077, %v2074
      %v2096 = vunpack.c.l.b16 %v2080
      %v2097 = vunpack.c.h.b16 %v2080
      %v2098 = vunpack.c.l.b16 %v2081
      %v2099 = vunpack.c.h.b16 %v2081
      %v2100 = vunpack.c.l.b16 %v2082
      %v2101 = vunpack.c.h.b16 %v2082
      %v2102 = vunpack.c.l.b16 %v2083
      %v2103 = vunpack.c.h.b16 %v2083
      %v2104 = vunpack.c.l.b16 %v2084
      %v2105 = vunpack.c.h.b16 %v2084
      %v2106 = vunpack.c.l.b16 %v2085
      %v2107 = vunpack.c.h.b16 %v2085
      %v2108 = vunpack.c.l.b16 %v2086
      %v2109 = vunpack.c.h.b16 %v2086
      %v2110 = vunpack.c.l.b16 %v2087
      %v2111 = vunpack.c.h.b16 %v2087
      %v2112 = vpack.c.b16 %v2096, %v2096
      %v2113 = vpack.c.b16 %v2097, %v2097
      %v2114 = vpack.c.b16 %v2098, %v2098
      %v2115 = vpack.c.b16 %v2099, %v2099
      %v2116 = vpack.c.b16 %v2100, %v2100
      %v2117 = vpack.c.b16 %v2101, %v2101
      %v2118 = vpack.c.b16 %v2102, %v2102
      %v2119 = vpack.c.b16 %v2103, %v2103
      %v2120 = vpack.c.b16 %v2104, %v2104
      %v2121 = vpack.c.b16 %v2105, %v2105
      %v2122 = vpack.c.b16 %v2106, %v2106
      %v2123 = vpack.c.b16 %v2107, %v2107
      %v2124 = vpack.c.b16 %v2108, %v2108
      %v2125 = vpack.c.b16 %v2109, %v2109
      %v2126 = vpack.c.b16 %v2110, %v2110
      %v2127 = vpack.c.b16 %v2111, %v2111
      %vm2144 = vcmask 519168
      %2145 = vst.msk [vmem:[%s603] sm:$0xf] %vm2144, %v2112
      %2146 = vst.msk [vmem:[%s603 + $0x4] sm:$0xf] %vm2144, %v2113
      %2147 = vst.msk [vmem:[%s603 + $0x8] sm:$0xf] %vm2144, %v2114
      %2148 = vst.msk [vmem:[%s603 + $0xc] sm:$0xf] %vm2144, %v2115
      %2149 = vst.msk [vmem:[%s603 + $0x10] sm:$0xf] %vm2144, %v2116
      %2150 = vst.msk [vmem:[%s603 + $0x14] sm:$0xf] %vm2144, %v2117
      %2151 = vst.msk [vmem:[%s603 + $0x18] sm:$0xf] %vm2144, %v2118
      %2152 = vst.msk [vmem:[%s603 + $0x1c] sm:$0xf] %vm2144, %v2119
      %2153 = vst.msk [vmem:[%s603 + $0x20] sm:$0xf] %vm2144, %v2120
      %2154 = vst.msk [vmem:[%s603 + $0x24] sm:$0xf] %vm2144, %v2121
      %2155 = vst.msk [vmem:[%s603 + $0x28] sm:$0xf] %vm2144, %v2122
      %2156 = vst.msk [vmem:[%s603 + $0x2c] sm:$0xf] %vm2144, %v2123
      %2157 = vst.msk [vmem:[%s603 + $0x30] sm:$0xf] %vm2144, %v2124
      %2158 = vst.msk [vmem:[%s603 + $0x34] sm:$0xf] %vm2144, %v2125
      %2159 = vst.msk [vmem:[%s603 + $0x38] sm:$0xf] %vm2144, %v2126
      %2160 = vst.msk [vmem:[%s603 + $0x3c] sm:$0xf] %vm2144, %v2127
      %p2161 = scmp.lt.s32.totalorder %s30, 1
      %s2162 = scalar_select %p2161, %s30, 1
      %s2163 = smul.addr %s2162, 4
      %s2164 = scalar_lea.vmem %s17, %s2163
      %p2165 = scmp.lt.s32.totalorder %s30, 1
      %s2166 = scalar_select %p2165, %s30, 1
      %s2167 = smul.addr %s2166, 16
      %s2168 = smul.addr %s2167, 4
      %s2169 = scalar_lea.vmem %s18, %s2168
      // Predicated region
      $region89: #{tpu_custom_call.1} parent=87 // pred_check
        %p2170 = pneg %p415
      $region90: #{tpu_custom_call.1} parent=87 // pred_check_branch
        %2172 = sbr.rel (%p2170) target = $region92
      $region91: #{tpu_custom_call.1} parent=87 // pred_region
        _
      $region92: #{tpu_custom_call.1} parent=87 // pred_fallthru
        _
      // Predicated region
      $region93: #{tpu_custom_call.1} parent=87 // pred_check
        %p2173 = pneg %p441
      $region94: #{tpu_custom_call.1} parent=87 // pred_check_branch
        %2175 = sbr.rel (%p2173) target = $region96
      $region95: #{tpu_custom_call.1} parent=87 // pred_region
        _
      $region96: #{tpu_custom_call.1} parent=87 // pred_fallthru
        _
    $region88: #{tpu_custom_call.1} parent=5 // pred_fallthru
      _
    %p2176 = scmp.le.s32.totalorder 2, %s25
    // Predicated region
    $region97: #{tpu_custom_call.1} parent=5 // pred_check
      %p2177 = pneg %p2176
    $region98: #{tpu_custom_call.1} parent=5 // pred_check_branch
      %2179 = sbr.rel (%p2177) target = $region100
    $region99: #{tpu_custom_call.1} parent=5 // pred_region
      %s2180 = ssub.s32 %s25, 2
      // Predicated region
      $region101: #{tpu_custom_call.1} parent=99 // pred_check
        %p2181 = pneg %p421
      $region102: #{tpu_custom_call.1} parent=99 // pred_check_branch
        %2183 = sbr.rel (%p2181) target = $region104
      $region103: #{tpu_custom_call.1} parent=99 // pred_region
        %p2184 = scmp.lt.s32.totalorder %s31, 1
        %s2185 = scalar_select %p2184, %s31, 1
        %s2186 = smul.addr %s2185, 4
        %s2187 = scalar_lea.vmem %s17, %s2186
      $region104: #{tpu_custom_call.1} parent=99 // pred_fallthru
        _
      // Predicated region
      $region105: #{tpu_custom_call.1} parent=99 // pred_check
        %p2188 = pneg %p447
      $region106: #{tpu_custom_call.1} parent=99 // pred_check_branch
        %2190 = sbr.rel (%p2188) target = $region108
      $region107: #{tpu_custom_call.1} parent=99 // pred_region
        %p2191 = scmp.lt.s32.totalorder %s31, 1
        %s2192 = scalar_select %p2191, %s31, 1
        %s2193 = smul.addr %s2192, 16
        %s2194 = smul.addr %s2193, 4
        %s2195 = scalar_lea.vmem %s18, %s2194
      $region108: #{tpu_custom_call.1} parent=99 // pred_fallthru
        _
    $region100: #{tpu_custom_call.1} parent=5 // pred_fallthru
      _
  $region6: #{tpu_custom_call.1} parent=0 // loop_footer
    %s29 = sadd.s32 1, %s25
  $region7: #{tpu_custom_call.1} parent=0 // loop_footer_branch
    %24 = sbr.rel target = $region3
  $region8: #{tpu_custom_call.1} parent=0 // loop_exit
    _

</llo_original>
